<compile_context>
chip_gen: v5e
topology: v5e:2x2
jax: 0.10.0
libtpu: 0.0.40
codegen_flags: <defaults>
</compile_context>

<pallas_src>
import jax
import jax.numpy as jnp
from jax.experimental import pallas as pl
from jax.experimental.pallas import tpu as pltpu

LANE = 128  # linear4 output padded to one full lane width


def _round_up(x, m):
    return ((x + m - 1) // m) * m


def _value_kernel(x_ref, w1_ref, b1_ref, w2_ref, b2_ref, w3_ref, b3_ref,
                  w4_ref, b4_ref, out_ref):
    """One batch tile of the 4-layer MLP; all weights resident in VMEM."""
    # In-kernel f32 -> bf16 cast (saves a wrapper-level elementwise kernel).
    x = x_ref[...].astype(jnp.bfloat16)                               # (TB, DP)

    h = jnp.dot(x, w1_ref[...], preferred_element_type=jnp.float32) + b1_ref[...]
    h = jnp.maximum(h.astype(jnp.bfloat16), 0)   # bf16 ReLU == bf16(relu(f32))

    h = jnp.dot(h, w2_ref[...], preferred_element_type=jnp.float32) + b2_ref[...]
    h = jnp.maximum(h.astype(jnp.bfloat16), 0)

    h = jnp.dot(h, w3_ref[...], preferred_element_type=jnp.float32) + b3_ref[...]
    h = jnp.maximum(h.astype(jnp.bfloat16), 0)

    # linear4 padded to 128 output columns -> lane-dense (TB, 128) f32 store.
    q = jnp.dot(h, w4_ref[...], preferred_element_type=jnp.float32) + b4_ref[...]
    out_ref[...] = q


@jax.jit
def value_forward(state, params):
    """state: [B, state_dim] float32 -> value: [B, 1] float32."""
    w1, b1, w2, b2, w3, b3, w4p, b4p = params
    B, D = state.shape
    DP, H = w1.shape          # DP = state_dim rounded up to a multiple of 128

    # Batch tiling:
    #  * B <= 256: one tile, one grid step (deployment latency path, B ~ 8).
    #  * B  > 256: tiles of up to 1024 rows, but never fewer than 2 grid steps
    #    so the "parallel" axis can be split across v7x's two TensorCores.
    if B <= 256:
        TB = _round_up(B, 8)
    else:
        TB = min(1024, _round_up(pl.cdiv(B, 2), 8))
    B_pad = _round_up(B, TB)

    x = state
    if B_pad != B or DP != D:
        # Single pad covering both batch rows and the 400 -> 512 feature pad.
        x = jnp.pad(x, ((0, B_pad - B), (0, DP - D)))

    grid = (B_pad // TB,)

    in_specs = [
        pl.BlockSpec((TB, DP), lambda i: (i, 0)),     # state tile (streamed, f32)
        pl.BlockSpec((DP, H), lambda i: (0, 0)),      # w1 (resident, row-padded)
        pl.BlockSpec((1, H), lambda i: (0, 0)),       # b1
        pl.BlockSpec((H, H), lambda i: (0, 0)),       # w2
        pl.BlockSpec((1, H), lambda i: (0, 0)),       # b2
        pl.BlockSpec((H, H), lambda i: (0, 0)),       # w3
        pl.BlockSpec((1, H), lambda i: (0, 0)),       # b3
        pl.BlockSpec((H, LANE), lambda i: (0, 0)),    # w4 padded to 128 cols
        pl.BlockSpec((1, LANE), lambda i: (0, 0)),    # b4 padded
    ]
    out_spec = pl.BlockSpec((TB, LANE), lambda i: (i, 0))

    flops = 2 * B_pad * (DP * H + H * H + H * H + H * LANE)
    bytes_accessed = (
        x.size * 4                                            # f32 state tiles
        + (w1.size + w2.size + w3.size + w4p.size) * 2        # bf16 weights
        + (b1.size + b2.size + b3.size + b4p.size) * 4        # f32 biases
        + B_pad * LANE * 4)                                   # f32 output slab

    # v5e's default scoped VMEM is 16 MiB; raise it for the big-tile path.
    vmem_limit = (48 * 1024 * 1024) if TB > 256 else None

    out = pl.pallas_call(
        _value_kernel,
        out_shape=jax.ShapeDtypeStruct((B_pad, LANE), jnp.float32),
        grid=grid,
        in_specs=in_specs,
        out_specs=out_spec,
        compiler_params=pltpu.CompilerParams(
            dimension_semantics=("parallel",),
            vmem_limit_bytes=vmem_limit),
        cost_estimate=pl.CostEstimate(
            flops=flops, transcendentals=0, bytes_accessed=bytes_accessed),
    )(x, w1, b1, w2, b2, w3, b3, w4p, b4p)

    # Lane-dense slab -> logical [B, 1] value (slice fuses into the same jit;
    # callers that can consume column 0 of the slab directly should do so).
    return out[:B, :1]


def init_value_params(key, state_dim, hidden_dim, init_w=0.003):
    """Deterministic init mimicking the PyTorch module's __init__.

    nn.Linear default init: U(-1/sqrt(fan_in), 1/sqrt(fan_in)) for weight & bias.
    linear4 weight & bias: U(-init_w, init_w).
    Weights stored as (in, out) bf16; biases as (1, out) f32.
    Padding applied once here: w1 rows padded state_dim -> round_up(128) so the
    first matmul's K dim is lane-aligned; linear4 weight/bias zero-padded to 128
    output columns for a lane-dense output store (only column 0 is real).
    """
    keys = jax.random.split(key, 8)

    def lin_init(kw, kb, fan_in, fan_out):
        bound = 1.0 / (fan_in ** 0.5)
        w = jax.random.uniform(kw, (fan_in, fan_out), jnp.float32, -bound, bound)
        b = jax.random.uniform(kb, (1, fan_out), jnp.float32, -bound, bound)
        return w, b

    w1, b1 = lin_init(keys[0], keys[1], state_dim, hidden_dim)
    w2, b2 = lin_init(keys[2], keys[3], hidden_dim, hidden_dim)
    w3, b3 = lin_init(keys[4], keys[5], hidden_dim, hidden_dim)
    w4 = jax.random.uniform(keys[6], (hidden_dim, 1), jnp.float32, -init_w, init_w)
    b4 = jax.random.uniform(keys[7], (1, 1), jnp.float32, -init_w, init_w)

    DP = _round_up(state_dim, LANE)
    w1p = jnp.pad(w1, ((0, DP - state_dim), (0, 0)))
    w4p = jnp.pad(w4, ((0, 0), (0, LANE - 1)))
    b4p = jnp.pad(b4, ((0, 0), (0, LANE - 1)))

    return (w1p.astype(jnp.bfloat16), b1,
            w2.astype(jnp.bfloat16), b2,
            w3.astype(jnp.bfloat16), b3,
            w4p.astype(jnp.bfloat16), b4p)


def _reference_forward(state, params):
    """Pure-JAX reference using the same bf16-matmul / f32-accumulate recipe."""
    w1p, b1, w2, b2, w3, b3, w4p, b4p = params
    _, D = state.shape
    DP = w1p.shape[0]
    x = jnp.pad(state, ((0, 0), (0, DP - D))).astype(jnp.bfloat16)
    h = jax.nn.relu(jnp.dot(x, w1p, preferred_element_type=jnp.float32) + b1)
    h = jax.nn.relu(jnp.dot(h.astype(jnp.bfloat16), w2,
                            preferred_element_type=jnp.float32) + b2)
    h = jax.nn.relu(jnp.dot(h.astype(jnp.bfloat16), w3,
                            preferred_element_type=jnp.float32) + b3)
    q = jnp.dot(h.astype(jnp.bfloat16), w4p,
                preferred_element_type=jnp.float32) + b4p
    return q[:, :1]


if __name__ == "__main__":
    n_index = 80
    state_dim = 5 * n_index      # 400, as in the module
    hidden_dim = 512             # as in the module

    key = jax.random.PRNGKey(0)
    k_small, k_big, k_params = jax.random.split(key, 3)
    params = init_value_params(k_params, state_dim, hidden_dim)

    # Deployment-sized batch: single tile, single grid step (latency path).
    state_small = jax.random.normal(k_small, (8, state_dim), jnp.float32)
    v_small = jax.block_until_ready(value_forward(state_small, params))
    v_small_ref = _reference_forward(state_small, params)
    assert v_small.shape == (8, 1)
    assert jnp.allclose(v_small, v_small_ref, atol=2e-3, rtol=2e-3), (
        f"max abs err {float(jnp.max(jnp.abs(v_small - v_small_ref)))}")

    # Larger batch: exercises batch+feature padding, big tiles and >=2 grid steps.
    state_big = jax.random.normal(k_big, (1000, state_dim), jnp.float32)
    v_big = jax.block_until_ready(value_forward(state_big, params))
    v_big_ref = _reference_forward(state_big, params)
    assert v_big.shape == (1000, 1)
    assert jnp.allclose(v_big, v_big_ref, atol=2e-3, rtol=2e-3), (
        f"max abs err {float(jnp.max(jnp.abs(v_big - v_big_ref)))}")

    print("KERNEL_OK")
</pallas_src>

<mosaic_0001>
module attributes {stable_mosaic.version = 11 : i64} {
  func.func @_value_kernel(%arg0: i32, %arg1: memref<8x512xf32, #tpu.memory_space<vmem>>, %arg2: memref<512x512xbf16, #tpu.memory_space<vmem>>, %arg3: memref<1x512xf32, #tpu.memory_space<vmem>>, %arg4: memref<512x512xbf16, #tpu.memory_space<vmem>>, %arg5: memref<1x512xf32, #tpu.memory_space<vmem>>, %arg6: memref<512x512xbf16, #tpu.memory_space<vmem>>, %arg7: memref<1x512xf32, #tpu.memory_space<vmem>>, %arg8: memref<512x128xbf16, #tpu.memory_space<vmem>>, %arg9: memref<1x128xf32, #tpu.memory_space<vmem>>, %arg10: memref<8x128xf32, #tpu.memory_space<vmem>>) attributes {dimension_semantics = [#tpu.dimension_semantics<parallel>], iteration_bounds = array<i64: 1>, scalar_prefetch = 0 : i64, scratch_operands = 0 : i64, tpu.core_type = #tpu.core_type<tc>, window_params = [{transform_indices = @transform_0, window_bounds = array<i64: 8, 512>}, {pipeline_mode = #tpu.pipeline_mode<synchronous>, transform_indices = @transform_1, window_bounds = array<i64: 512, 512>}, {pipeline_mode = #tpu.pipeline_mode<synchronous>, transform_indices = @transform_2, window_bounds = array<i64: 1, 512>}, {pipeline_mode = #tpu.pipeline_mode<synchronous>, transform_indices = @transform_3, window_bounds = array<i64: 512, 512>}, {pipeline_mode = #tpu.pipeline_mode<synchronous>, transform_indices = @transform_4, window_bounds = array<i64: 1, 512>}, {pipeline_mode = #tpu.pipeline_mode<synchronous>, transform_indices = @transform_5, window_bounds = array<i64: 512, 512>}, {pipeline_mode = #tpu.pipeline_mode<synchronous>, transform_indices = @transform_6, window_bounds = array<i64: 1, 512>}, {pipeline_mode = #tpu.pipeline_mode<synchronous>, transform_indices = @transform_7, window_bounds = array<i64: 512, 128>}, {pipeline_mode = #tpu.pipeline_mode<synchronous>, transform_indices = @transform_8, window_bounds = array<i64: 1, 128>}, {transform_indices = @transform_9, window_bounds = array<i64: 8, 128>}]} {
    %c0 = arith.constant 0 : index
    %c0_0 = arith.constant 0 : index
    %0 = vector.load %arg1[%c0, %c0_0] : memref<8x512xf32, #tpu.memory_space<vmem>>, vector<8x512xf32>
    %1 = arith.truncf %0 : vector<8x512xf32> to vector<8x512xbf16>
    %c0_1 = arith.constant 0 : index
    %c0_2 = arith.constant 0 : index
    %2 = vector.load %arg2[%c0_1, %c0_2] : memref<512x512xbf16, #tpu.memory_space<vmem>>, vector<512x512xbf16>
    %cst = arith.constant dense<0.000000e+00> : vector<8x512xf32>
    %3 = tpu.matmul %1, %2, %cst {dimension_numbers = #tpu.dot_dimension_numbers<[1], [0], [0], [1], [0, 0, 1, 1], [], []>} : vector<8x512xbf16>, vector<512x512xbf16>, vector<8x512xf32> -> vector<8x512xf32>
    %c0_3 = arith.constant 0 : index
    %c0_4 = arith.constant 0 : index
    %4 = vector.load %arg3[%c0_3, %c0_4] : memref<1x512xf32, #tpu.memory_space<vmem>>, vector<1x512xf32>
    %5 = vector.broadcast %4 : vector<1x512xf32> to vector<8x512xf32>
    %6 = arith.addf %3, %5 : vector<8x512xf32>
    %7 = arith.truncf %6 : vector<8x512xf32> to vector<8x512xbf16>
    %cst_5 = arith.constant 0.000000e+00 : bf16
    %8 = vector.broadcast %cst_5 : bf16 to vector<8x512xbf16>
    %9 = arith.maximumf %7, %8 : vector<8x512xbf16>
    %c0_6 = arith.constant 0 : index
    %c0_7 = arith.constant 0 : index
    %10 = vector.load %arg4[%c0_6, %c0_7] : memref<512x512xbf16, #tpu.memory_space<vmem>>, vector<512x512xbf16>
    %cst_8 = arith.constant dense<0.000000e+00> : vector<8x512xf32>
    %11 = tpu.matmul %9, %10, %cst_8 {dimension_numbers = #tpu.dot_dimension_numbers<[1], [0], [0], [1], [0, 0, 1, 1], [], []>} : vector<8x512xbf16>, vector<512x512xbf16>, vector<8x512xf32> -> vector<8x512xf32>
    %c0_9 = arith.constant 0 : index
    %c0_10 = arith.constant 0 : index
    %12 = vector.load %arg5[%c0_9, %c0_10] : memref<1x512xf32, #tpu.memory_space<vmem>>, vector<1x512xf32>
    %13 = vector.broadcast %12 : vector<1x512xf32> to vector<8x512xf32>
    %14 = arith.addf %11, %13 : vector<8x512xf32>
    %15 = arith.truncf %14 : vector<8x512xf32> to vector<8x512xbf16>
    %cst_11 = arith.constant 0.000000e+00 : bf16
    %16 = vector.broadcast %cst_11 : bf16 to vector<8x512xbf16>
    %17 = arith.maximumf %15, %16 : vector<8x512xbf16>
    %c0_12 = arith.constant 0 : index
    %c0_13 = arith.constant 0 : index
    %18 = vector.load %arg6[%c0_12, %c0_13] : memref<512x512xbf16, #tpu.memory_space<vmem>>, vector<512x512xbf16>
    %cst_14 = arith.constant dense<0.000000e+00> : vector<8x512xf32>
    %19 = tpu.matmul %17, %18, %cst_14 {dimension_numbers = #tpu.dot_dimension_numbers<[1], [0], [0], [1], [0, 0, 1, 1], [], []>} : vector<8x512xbf16>, vector<512x512xbf16>, vector<8x512xf32> -> vector<8x512xf32>
    %c0_15 = arith.constant 0 : index
    %c0_16 = arith.constant 0 : index
    %20 = vector.load %arg7[%c0_15, %c0_16] : memref<1x512xf32, #tpu.memory_space<vmem>>, vector<1x512xf32>
    %21 = vector.broadcast %20 : vector<1x512xf32> to vector<8x512xf32>
    %22 = arith.addf %19, %21 : vector<8x512xf32>
    %23 = arith.truncf %22 : vector<8x512xf32> to vector<8x512xbf16>
    %cst_17 = arith.constant 0.000000e+00 : bf16
    %24 = vector.broadcast %cst_17 : bf16 to vector<8x512xbf16>
    %25 = arith.maximumf %23, %24 : vector<8x512xbf16>
    %c0_18 = arith.constant 0 : index
    %c0_19 = arith.constant 0 : index
    %26 = vector.load %arg8[%c0_18, %c0_19] : memref<512x128xbf16, #tpu.memory_space<vmem>>, vector<512x128xbf16>
    %cst_20 = arith.constant dense<0.000000e+00> : vector<8x128xf32>
    %27 = tpu.matmul %25, %26, %cst_20 {dimension_numbers = #tpu.dot_dimension_numbers<[1], [0], [0], [1], [0, 0, 1, 1], [], []>} : vector<8x512xbf16>, vector<512x128xbf16>, vector<8x128xf32> -> vector<8x128xf32>
    %c0_21 = arith.constant 0 : index
    %c0_22 = arith.constant 0 : index
    %28 = vector.load %arg9[%c0_21, %c0_22] : memref<1x128xf32, #tpu.memory_space<vmem>>, vector<1x128xf32>
    %29 = vector.broadcast %28 : vector<1x128xf32> to vector<8x128xf32>
    %30 = arith.addf %27, %29 : vector<8x128xf32>
    %c0_23 = arith.constant 0 : index
    %c0_24 = arith.constant 0 : index
    %31 = vector.load %arg10[%c0_23, %c0_24] : memref<8x128xf32, #tpu.memory_space<vmem>>, vector<8x128xf32>
    tpu.vector_store %arg10[%c0_23, %c0_24], %30 {strides = array<i32>} : memref<8x128xf32, #tpu.memory_space<vmem>>, vector<8x128xf32>,
    return
  }
  func.func @transform_0(%arg0: i32) -> (i32, i32) {
    %c0_i32 = arith.constant 0 : i32
    %c0_i32_0 = arith.constant 0 : i32
    return %arg0, %c0_i32 : i32, i32
  }
  func.func @transform_1(%arg0: i32) -> (i32, i32) {
    %c0_i32 = arith.constant 0 : i32
    %c0_i32_0 = arith.constant 0 : i32
    %c0_i32_1 = arith.constant 0 : i32
    return %c0_i32, %c0_i32_0 : i32, i32
  }
  func.func @transform_2(%arg0: i32) -> (i32, i32) {
    %c0_i32 = arith.constant 0 : i32
    %c0_i32_0 = arith.constant 0 : i32
    %c0_i32_1 = arith.constant 0 : i32
    return %c0_i32, %c0_i32_0 : i32, i32
  }
  func.func @transform_3(%arg0: i32) -> (i32, i32) {
    %c0_i32 = arith.constant 0 : i32
    %c0_i32_0 = arith.constant 0 : i32
    %c0_i32_1 = arith.constant 0 : i32
    return %c0_i32, %c0_i32_0 : i32, i32
  }
  func.func @transform_4(%arg0: i32) -> (i32, i32) {
    %c0_i32 = arith.constant 0 : i32
    %c0_i32_0 = arith.constant 0 : i32
    %c0_i32_1 = arith.constant 0 : i32
    return %c0_i32, %c0_i32_0 : i32, i32
  }
  func.func @transform_5(%arg0: i32) -> (i32, i32) {
    %c0_i32 = arith.constant 0 : i32
    %c0_i32_0 = arith.constant 0 : i32
    %c0_i32_1 = arith.constant 0 : i32
    return %c0_i32, %c0_i32_0 : i32, i32
  }
  func.func @transform_6(%arg0: i32) -> (i32, i32) {
    %c0_i32 = arith.constant 0 : i32
    %c0_i32_0 = arith.constant 0 : i32
    %c0_i32_1 = arith.constant 0 : i32
    return %c0_i32, %c0_i32_0 : i32, i32
  }
  func.func @transform_7(%arg0: i32) -> (i32, i32) {
    %c0_i32 = arith.constant 0 : i32
    %c0_i32_0 = arith.constant 0 : i32
    %c0_i32_1 = arith.constant 0 : i32
    return %c0_i32, %c0_i32_0 : i32, i32
  }
  func.func @transform_8(%arg0: i32) -> (i32, i32) {
    %c0_i32 = arith.constant 0 : i32
    %c0_i32_0 = arith.constant 0 : i32
    %c0_i32_1 = arith.constant 0 : i32
    return %c0_i32, %c0_i32_0 : i32, i32
  }
  func.func @transform_9(%arg0: i32) -> (i32, i32) {
    %c0_i32 = arith.constant 0 : i32
    %c0_i32_0 = arith.constant 0 : i32
    return %arg0, %c0_i32 : i32, i32
  }
}

</mosaic_0001>

<llo_original>
// kernel: value_forward.1
$region0: #{value_forward.1}
  #allocation0 [shape = 'u32[]', space=smem, size = 0x4, offset = 0x4, fixed_abs, tag = 'smem constant byte address 0x4 - core index']
  #allocation1 [shape = 'u32[72,128]{1,0:T(1,128)}', space=vmem, size = 0x9000, scoped, tag = 'internal scratch']
  %s0 = inlined_call_operand.vmem [shape: f32[8,512], index: 0, kind: input, shape index: {}]
  %s1 = inlined_call_operand.hbm [shape: bf16[512,512], index: 1, kind: input, shape index: {}]
  %s2 = inlined_call_operand.vmem [shape: f32[1,512], index: 2, kind: input, shape index: {}]
  %s3 = inlined_call_operand.hbm [shape: bf16[512,512], index: 3, kind: input, shape index: {}]
  %s4 = inlined_call_operand.vmem [shape: f32[1,512], index: 4, kind: input, shape index: {}]
  %s5 = inlined_call_operand.hbm [shape: bf16[512,512], index: 5, kind: input, shape index: {}]
  %s6 = inlined_call_operand.vmem [shape: f32[1,512], index: 6, kind: input, shape index: {}]
  %s7 = inlined_call_operand.hbm [shape: bf16[512,128], index: 7, kind: input, shape index: {}]
  %s8 = inlined_call_operand.vmem [shape: f32[1,128], index: 8, kind: input, shape index: {}]
  %s9 = inlined_call_operand.vmem [shape: f32[8,128], index: 9, kind: output, shape index: {}]
  %s10 = sld [smem:[#allocation0]]
  $region62: #{value_forward.1} parent=0
    _
  %s12 = ssub.s32 1, %s10
  %s13 = scalar_select 0, %s12, %s10
  $region1: #{value_forward.1} parent=0
    #allocation2 [shape = 'u8[524288]{0}', space=vmem, size = 0x80000, scoped, tag = 'input window, operand 1, single buffered']
    #allocation3 [shape = 's32[1]{0}', space=sflag, size = 0x4, scoped, tag = 'scoped memory for value_forward.1']
    #allocation4 [shape = 'u8[524288]{0}', space=vmem, size = 0x80000, scoped, tag = 'input window, operand 3, single buffered']
    #allocation5 [shape = 's32[1]{0}', space=sflag, size = 0x4, scoped, tag = 'scoped memory for value_forward.1']
    #allocation6 [shape = 'u8[524288]{0}', space=vmem, size = 0x80000, scoped, tag = 'input window, operand 5, single buffered']
    #allocation7 [shape = 'u8[131072]{0}', space=vmem, size = 0x20000, scoped, tag = 'input window, operand 7, single buffered']
    #allocation8 [shape = 's32[1]{0}', space=sflag, size = 0x4, scoped, tag = 'scoped memory for value_forward.1']
    %14 = vsyncpa [#allocation3], 0
    %15 = vsyncpa [#allocation5], 0
    %16 = vsyncpa [#allocation8], 0
    // Predicated region
    $region2: #{value_forward.1} parent=1 // pred_check
      _
    $region3: #{value_forward.1} parent=1 // pred_check_branch
      %18 = sbr.rel (0) target = $region5
    $region4: #{value_forward.1} parent=1 // pred_region
      _
    $region5: #{value_forward.1} parent=1 // pred_fallthru
      _
    // Predicated region
    $region6: #{value_forward.1} parent=1 // pred_check
      _
    $region7: #{value_forward.1} parent=1 // pred_check_branch
      %20 = sbr.rel (0) target = $region9
    $region8: #{value_forward.1} parent=1 // pred_region
      %22 = vsyncadd [#allocation3], 0
      %s23 = sshll.u32 %s1, 4
      %s24 = int_to_ptr.hbm [resolvable:$true] %s23
      %s25 = sshll.u32 [#allocation2], 4
      %s26 = int_to_ptr.vmem [resolvable:$true] %s25
      %31 = dma.hbm_to_vmem [thread:$0]  %s24, 16384, %s26, [#allocation3], 256, 256, 16
    $region9: #{value_forward.1} parent=1 // pred_fallthru
      _
    // Predicated region
    $region10: #{value_forward.1} parent=1 // pred_check
      _
    $region11: #{value_forward.1} parent=1 // pred_check_branch
      %33 = sbr.rel (0) target = $region13
    $region12: #{value_forward.1} parent=1 // pred_region
      _
    $region13: #{value_forward.1} parent=1 // pred_fallthru
      _
    // Predicated region
    $region14: #{value_forward.1} parent=1 // pred_check
      _
    $region15: #{value_forward.1} parent=1 // pred_check_branch
      %35 = sbr.rel (0) target = $region17
    $region16: #{value_forward.1} parent=1 // pred_region
      %37 = vsyncadd [#allocation5], 0
      %s38 = sshll.u32 %s3, 4
      %s39 = int_to_ptr.hbm [resolvable:$true] %s38
      %s40 = sshll.u32 [#allocation4], 4
      %s41 = int_to_ptr.vmem [resolvable:$true] %s40
      %46 = dma.hbm_to_vmem [thread:$0]  %s39, 16384, %s41, [#allocation5], 256, 256, 16
    $region17: #{value_forward.1} parent=1 // pred_fallthru
      _
    // Predicated region
    $region18: #{value_forward.1} parent=1 // pred_check
      _
    $region19: #{value_forward.1} parent=1 // pred_check_branch
      %48 = sbr.rel (0) target = $region21
    $region20: #{value_forward.1} parent=1 // pred_region
      _
    $region21: #{value_forward.1} parent=1 // pred_fallthru
      _
    // Predicated region
    $region22: #{value_forward.1} parent=1 // pred_check
      _
    $region23: #{value_forward.1} parent=1 // pred_check_branch
      %50 = sbr.rel (0) target = $region25
    $region24: #{value_forward.1} parent=1 // pred_region
      %52 = vsyncadd [#allocation5], 0
      %s53 = sshll.u32 %s5, 4
      %s54 = int_to_ptr.hbm [resolvable:$true] %s53
      %s55 = sshll.u32 [#allocation6], 4
      %s56 = int_to_ptr.vmem [resolvable:$true] %s55
      %61 = dma.hbm_to_vmem [thread:$0]  %s54, 16384, %s56, [#allocation5], 256, 256, 16
    $region25: #{value_forward.1} parent=1 // pred_fallthru
      _
    // Predicated region
    $region26: #{value_forward.1} parent=1 // pred_check
      _
    $region27: #{value_forward.1} parent=1 // pred_check_branch
      %63 = sbr.rel (0) target = $region29
    $region28: #{value_forward.1} parent=1 // pred_region
      _
    $region29: #{value_forward.1} parent=1 // pred_fallthru
      _
    // Predicated region
    $region30: #{value_forward.1} parent=1 // pred_check
      _
    $region31: #{value_forward.1} parent=1 // pred_check_branch
      %65 = sbr.rel (0) target = $region33
    $region32: #{value_forward.1} parent=1 // pred_region
      %67 = vsyncadd [#allocation8], 0
      %s68 = sshll.u32 %s7, 4
      %s69 = int_to_ptr.hbm [resolvable:$true] %s68
      %s70 = sshll.u32 [#allocation7], 4
      %s71 = int_to_ptr.vmem [resolvable:$true] %s70
      %76 = dma.hbm_to_vmem [thread:$0]  %s69, 4096, %s71, [#allocation8], 64, 64, 4
    $region33: #{value_forward.1} parent=1 // pred_fallthru
      _
    // Predicated region
    $region34: #{value_forward.1} parent=1 // pred_check
      _
    $region35: #{value_forward.1} parent=1 // pred_check_branch
      %78 = sbr.rel (0) target = $region37
    $region36: #{value_forward.1} parent=1 // pred_region
      _
    $region37: #{value_forward.1} parent=1 // pred_fallthru
      _
    // Predicated region
    $region38: #{value_forward.1} parent=1 // pred_check
      _
    $region39: #{value_forward.1} parent=1 // pred_check_branch
      %80 = sbr.rel (0) target = $region41
    $region40: #{value_forward.1} parent=1 // pred_region
      %82 = dma.done [#allocation3], 16384
    $region41: #{value_forward.1} parent=1 // pred_fallthru
      _
    // Predicated region
    $region42: #{value_forward.1} parent=1 // pred_check
      _
    $region43: #{value_forward.1} parent=1 // pred_check_branch
      %84 = sbr.rel (0) target = $region45
    $region44: #{value_forward.1} parent=1 // pred_region
      %86 = dma.done [#allocation5], 16384
    $region45: #{value_forward.1} parent=1 // pred_fallthru
      _
    // Predicated region
    $region46: #{value_forward.1} parent=1 // pred_check
      _
    $region47: #{value_forward.1} parent=1 // pred_check_branch
      %88 = sbr.rel (0) target = $region49
    $region48: #{value_forward.1} parent=1 // pred_region
      %90 = dma.done [#allocation5], 16384
    $region49: #{value_forward.1} parent=1 // pred_fallthru
      _
    // Predicated region
    $region50: #{value_forward.1} parent=1 // pred_check
      _
    $region51: #{value_forward.1} parent=1 // pred_check_branch
      %92 = sbr.rel (0) target = $region53
    $region52: #{value_forward.1} parent=1 // pred_region
      %94 = dma.done [#allocation8], 4096
    $region53: #{value_forward.1} parent=1 // pred_fallthru
      _
    %v95 = vld [vmem:[%s0] sm:$0xff]
    %v96 = vld [vmem:[%s0 + $0x8] sm:$0xff]
    %v97 = vld [vmem:[%s0 + $0x10] sm:$0xff]
    %v98 = vld [vmem:[%s0 + $0x18] sm:$0xff]
    %v99 = vpack.c.bf16 %v95, %v95
    %v100 = vpack.c.bf16 %v96, %v96
    %v101 = vpack.c.bf16 %v97, %v97
    %v102 = vpack.c.bf16 %v98, %v98
    %v103 = vld [vmem:[#allocation2] sm:$0xff]
    %v104 = vld [vmem:[#allocation2 + $0x8] sm:$0xff]
    %v105 = vld [vmem:[#allocation2 + $0x10] sm:$0xff]
    %v106 = vld [vmem:[#allocation2 + $0x18] sm:$0xff]
    %v107 = vld [vmem:[#allocation2 + $0x20] sm:$0xff]
    %v108 = vld [vmem:[#allocation2 + $0x28] sm:$0xff]
    %v109 = vld [vmem:[#allocation2 + $0x30] sm:$0xff]
    %v110 = vld [vmem:[#allocation2 + $0x38] sm:$0xff]
    %v111 = vld [vmem:[#allocation2 + $0x40] sm:$0xff]
    %v112 = vld [vmem:[#allocation2 + $0x48] sm:$0xff]
    %v113 = vld [vmem:[#allocation2 + $0x50] sm:$0xff]
    %v114 = vld [vmem:[#allocation2 + $0x58] sm:$0xff]
    %v115 = vld [vmem:[#allocation2 + $0x60] sm:$0xff]
    %v116 = vld [vmem:[#allocation2 + $0x68] sm:$0xff]
    %v117 = vld [vmem:[#allocation2 + $0x70] sm:$0xff]
    %v118 = vld [vmem:[#allocation2 + $0x78] sm:$0xff]
    %v119 = vld [vmem:[#allocation2 + $0x80] sm:$0xff]
    %v120 = vld [vmem:[#allocation2 + $0x88] sm:$0xff]
    %v121 = vld [vmem:[#allocation2 + $0x90] sm:$0xff]
    %v122 = vld [vmem:[#allocation2 + $0x98] sm:$0xff]
    %v123 = vld [vmem:[#allocation2 + $0xa0] sm:$0xff]
    %v124 = vld [vmem:[#allocation2 + $0xa8] sm:$0xff]
    %v125 = vld [vmem:[#allocation2 + $0xb0] sm:$0xff]
    %v126 = vld [vmem:[#allocation2 + $0xb8] sm:$0xff]
    %v127 = vld [vmem:[#allocation2 + $0xc0] sm:$0xff]
    %v128 = vld [vmem:[#allocation2 + $0xc8] sm:$0xff]
    %v129 = vld [vmem:[#allocation2 + $0xd0] sm:$0xff]
    %v130 = vld [vmem:[#allocation2 + $0xd8] sm:$0xff]
    %v131 = vld [vmem:[#allocation2 + $0xe0] sm:$0xff]
    %v132 = vld [vmem:[#allocation2 + $0xe8] sm:$0xff]
    %v133 = vld [vmem:[#allocation2 + $0xf0] sm:$0xff]
    %v134 = vld [vmem:[#allocation2 + $0xf8] sm:$0xff]
    %v135 = vld [vmem:[#allocation2 + $0x100] sm:$0xff]
    %v136 = vld [vmem:[#allocation2 + $0x108] sm:$0xff]
    %v137 = vld [vmem:[#allocation2 + $0x110] sm:$0xff]
    %v138 = vld [vmem:[#allocation2 + $0x118] sm:$0xff]
    %v139 = vld [vmem:[#allocation2 + $0x120] sm:$0xff]
    %v140 = vld [vmem:[#allocation2 + $0x128] sm:$0xff]
    %v141 = vld [vmem:[#allocation2 + $0x130] sm:$0xff]
    %v142 = vld [vmem:[#allocation2 + $0x138] sm:$0xff]
    %v143 = vld [vmem:[#allocation2 + $0x140] sm:$0xff]
    %v144 = vld [vmem:[#allocation2 + $0x148] sm:$0xff]
    %v145 = vld [vmem:[#allocation2 + $0x150] sm:$0xff]
    %v146 = vld [vmem:[#allocation2 + $0x158] sm:$0xff]
    %v147 = vld [vmem:[#allocation2 + $0x160] sm:$0xff]
    %v148 = vld [vmem:[#allocation2 + $0x168] sm:$0xff]
    %v149 = vld [vmem:[#allocation2 + $0x170] sm:$0xff]
    %v150 = vld [vmem:[#allocation2 + $0x178] sm:$0xff]
    %v151 = vld [vmem:[#allocation2 + $0x180] sm:$0xff]
    %v152 = vld [vmem:[#allocation2 + $0x188] sm:$0xff]
    %v153 = vld [vmem:[#allocation2 + $0x190] sm:$0xff]
    %v154 = vld [vmem:[#allocation2 + $0x198] sm:$0xff]
    %v155 = vld [vmem:[#allocation2 + $0x1a0] sm:$0xff]
    %v156 = vld [vmem:[#allocation2 + $0x1a8] sm:$0xff]
    %v157 = vld [vmem:[#allocation2 + $0x1b0] sm:$0xff]
    %v158 = vld [vmem:[#allocation2 + $0x1b8] sm:$0xff]
    %v159 = vld [vmem:[#allocation2 + $0x1c0] sm:$0xff]
    %v160 = vld [vmem:[#allocation2 + $0x1c8] sm:$0xff]
    %v161 = vld [vmem:[#allocation2 + $0x1d0] sm:$0xff]
    %v162 = vld [vmem:[#allocation2 + $0x1d8] sm:$0xff]
    %v163 = vld [vmem:[#allocation2 + $0x1e0] sm:$0xff]
    %v164 = vld [vmem:[#allocation2 + $0x1e8] sm:$0xff]
    %v165 = vld [vmem:[#allocation2 + $0x1f0] sm:$0xff]
    %v166 = vld [vmem:[#allocation2 + $0x1f8] sm:$0xff]
    %v167 = vld [vmem:[#allocation2 + $0x200] sm:$0xff]
    %v168 = vld [vmem:[#allocation2 + $0x208] sm:$0xff]
    %v169 = vld [vmem:[#allocation2 + $0x210] sm:$0xff]
    %v170 = vld [vmem:[#allocation2 + $0x218] sm:$0xff]
    %v171 = vld [vmem:[#allocation2 + $0x220] sm:$0xff]
    %v172 = vld [vmem:[#allocation2 + $0x228] sm:$0xff]
    %v173 = vld [vmem:[#allocation2 + $0x230] sm:$0xff]
    %v174 = vld [vmem:[#allocation2 + $0x238] sm:$0xff]
    %v175 = vld [vmem:[#allocation2 + $0x240] sm:$0xff]
    %v176 = vld [vmem:[#allocation2 + $0x248] sm:$0xff]
    %v177 = vld [vmem:[#allocation2 + $0x250] sm:$0xff]
    %v178 = vld [vmem:[#allocation2 + $0x258] sm:$0xff]
    %v179 = vld [vmem:[#allocation2 + $0x260] sm:$0xff]
    %v180 = vld [vmem:[#allocation2 + $0x268] sm:$0xff]
    %v181 = vld [vmem:[#allocation2 + $0x270] sm:$0xff]
    %v182 = vld [vmem:[#allocation2 + $0x278] sm:$0xff]
    %v183 = vld [vmem:[#allocation2 + $0x280] sm:$0xff]
    %v184 = vld [vmem:[#allocation2 + $0x288] sm:$0xff]
    %v185 = vld [vmem:[#allocation2 + $0x290] sm:$0xff]
    %v186 = vld [vmem:[#allocation2 + $0x298] sm:$0xff]
    %v187 = vld [vmem:[#allocation2 + $0x2a0] sm:$0xff]
    %v188 = vld [vmem:[#allocation2 + $0x2a8] sm:$0xff]
    %v189 = vld [vmem:[#allocation2 + $0x2b0] sm:$0xff]
    %v190 = vld [vmem:[#allocation2 + $0x2b8] sm:$0xff]
    %v191 = vld [vmem:[#allocation2 + $0x2c0] sm:$0xff]
    %v192 = vld [vmem:[#allocation2 + $0x2c8] sm:$0xff]
    %v193 = vld [vmem:[#allocation2 + $0x2d0] sm:$0xff]
    %v194 = vld [vmem:[#allocation2 + $0x2d8] sm:$0xff]
    %v195 = vld [vmem:[#allocation2 + $0x2e0] sm:$0xff]
    %v196 = vld [vmem:[#allocation2 + $0x2e8] sm:$0xff]
    %v197 = vld [vmem:[#allocation2 + $0x2f0] sm:$0xff]
    %v198 = vld [vmem:[#allocation2 + $0x2f8] sm:$0xff]
    %v199 = vld [vmem:[#allocation2 + $0x300] sm:$0xff]
    %v200 = vld [vmem:[#allocation2 + $0x308] sm:$0xff]
    %v201 = vld [vmem:[#allocation2 + $0x310] sm:$0xff]
    %v202 = vld [vmem:[#allocation2 + $0x318] sm:$0xff]
    %v203 = vld [vmem:[#allocation2 + $0x320] sm:$0xff]
    %v204 = vld [vmem:[#allocation2 + $0x328] sm:$0xff]
    %v205 = vld [vmem:[#allocation2 + $0x330] sm:$0xff]
    %v206 = vld [vmem:[#allocation2 + $0x338] sm:$0xff]
    %v207 = vld [vmem:[#allocation2 + $0x340] sm:$0xff]
    %v208 = vld [vmem:[#allocation2 + $0x348] sm:$0xff]
    %v209 = vld [vmem:[#allocation2 + $0x350] sm:$0xff]
    %v210 = vld [vmem:[#allocation2 + $0x358] sm:$0xff]
    %v211 = vld [vmem:[#allocation2 + $0x360] sm:$0xff]
    %v212 = vld [vmem:[#allocation2 + $0x368] sm:$0xff]
    %v213 = vld [vmem:[#allocation2 + $0x370] sm:$0xff]
    %v214 = vld [vmem:[#allocation2 + $0x378] sm:$0xff]
    %v215 = vld [vmem:[#allocation2 + $0x380] sm:$0xff]
    %v216 = vld [vmem:[#allocation2 + $0x388] sm:$0xff]
    %v217 = vld [vmem:[#allocation2 + $0x390] sm:$0xff]
    %v218 = vld [vmem:[#allocation2 + $0x398] sm:$0xff]
    %v219 = vld [vmem:[#allocation2 + $0x3a0] sm:$0xff]
    %v220 = vld [vmem:[#allocation2 + $0x3a8] sm:$0xff]
    %v221 = vld [vmem:[#allocation2 + $0x3b0] sm:$0xff]
    %v222 = vld [vmem:[#allocation2 + $0x3b8] sm:$0xff]
    %v223 = vld [vmem:[#allocation2 + $0x3c0] sm:$0xff]
    %v224 = vld [vmem:[#allocation2 + $0x3c8] sm:$0xff]
    %v225 = vld [vmem:[#allocation2 + $0x3d0] sm:$0xff]
    %v226 = vld [vmem:[#allocation2 + $0x3d8] sm:$0xff]
    %v227 = vld [vmem:[#allocation2 + $0x3e0] sm:$0xff]
    %v228 = vld [vmem:[#allocation2 + $0x3e8] sm:$0xff]
    %v229 = vld [vmem:[#allocation2 + $0x3f0] sm:$0xff]
    %v230 = vld [vmem:[#allocation2 + $0x3f8] sm:$0xff]
    %v231 = vld [vmem:[%s2] sm:$0xf]
    %v233 = vperm.slane %v231, 0
    %v234 = vperm.slane %v231, 1
    %v235 = vperm.slane %v231, 2
    %v236 = vperm.slane %v231, 3
    %v369 = vunpack.c.l.b16 %v103
    %v370 = vunpack.c.h.b16 %v103
    %v371 = vunpack.c.l.b16 %v104
    %v372 = vunpack.c.h.b16 %v104
    %v373 = vunpack.c.l.b16 %v105
    %v374 = vunpack.c.h.b16 %v105
    %v375 = vunpack.c.l.b16 %v106
    %v376 = vunpack.c.h.b16 %v106
    %v377 = vunpack.c.l.b16 %v107
    %v378 = vunpack.c.h.b16 %v107
    %v379 = vunpack.c.l.b16 %v108
    %v380 = vunpack.c.h.b16 %v108
    %v381 = vunpack.c.l.b16 %v109
    %v382 = vunpack.c.h.b16 %v109
    %v383 = vunpack.c.l.b16 %v110
    %v384 = vunpack.c.h.b16 %v110
    %v385 = vunpack.c.l.b16 %v111
    %v386 = vunpack.c.h.b16 %v111
    %v387 = vunpack.c.l.b16 %v112
    %v388 = vunpack.c.h.b16 %v112
    %v389 = vunpack.c.l.b16 %v113
    %v390 = vunpack.c.h.b16 %v113
    %v391 = vunpack.c.l.b16 %v114
    %v392 = vunpack.c.h.b16 %v114
    %v393 = vunpack.c.l.b16 %v115
    %v394 = vunpack.c.h.b16 %v115
    %v395 = vunpack.c.l.b16 %v116
    %v396 = vunpack.c.h.b16 %v116
    %v397 = vunpack.c.l.b16 %v117
    %v398 = vunpack.c.h.b16 %v117
    %v399 = vunpack.c.l.b16 %v118
    %v400 = vunpack.c.h.b16 %v118
    %v401 = vunpack.c.l.b16 %v119
    %v402 = vunpack.c.h.b16 %v119
    %v403 = vunpack.c.l.b16 %v120
    %v404 = vunpack.c.h.b16 %v120
    %v405 = vunpack.c.l.b16 %v121
    %v406 = vunpack.c.h.b16 %v121
    %v407 = vunpack.c.l.b16 %v122
    %v408 = vunpack.c.h.b16 %v122
    %v409 = vunpack.c.l.b16 %v123
    %v410 = vunpack.c.h.b16 %v123
    %v411 = vunpack.c.l.b16 %v124
    %v412 = vunpack.c.h.b16 %v124
    %v413 = vunpack.c.l.b16 %v125
    %v414 = vunpack.c.h.b16 %v125
    %v415 = vunpack.c.l.b16 %v126
    %v416 = vunpack.c.h.b16 %v126
    %v417 = vunpack.c.l.b16 %v127
    %v418 = vunpack.c.h.b16 %v127
    %v419 = vunpack.c.l.b16 %v128
    %v420 = vunpack.c.h.b16 %v128
    %v421 = vunpack.c.l.b16 %v129
    %v422 = vunpack.c.h.b16 %v129
    %v423 = vunpack.c.l.b16 %v130
    %v424 = vunpack.c.h.b16 %v130
    %v425 = vunpack.c.l.b16 %v131
    %v426 = vunpack.c.h.b16 %v131
    %v427 = vunpack.c.l.b16 %v132
    %v428 = vunpack.c.h.b16 %v132
    %v429 = vunpack.c.l.b16 %v133
    %v430 = vunpack.c.h.b16 %v133
    %v431 = vunpack.c.l.b16 %v134
    %v432 = vunpack.c.h.b16 %v134
    %v433 = vunpack.c.l.b16 %v135
    %v434 = vunpack.c.h.b16 %v135
    %v435 = vunpack.c.l.b16 %v136
    %v436 = vunpack.c.h.b16 %v136
    %v437 = vunpack.c.l.b16 %v137
    %v438 = vunpack.c.h.b16 %v137
    %v439 = vunpack.c.l.b16 %v138
    %v440 = vunpack.c.h.b16 %v138
    %v441 = vunpack.c.l.b16 %v139
    %v442 = vunpack.c.h.b16 %v139
    %v443 = vunpack.c.l.b16 %v140
    %v444 = vunpack.c.h.b16 %v140
    %v445 = vunpack.c.l.b16 %v141
    %v446 = vunpack.c.h.b16 %v141
    %v447 = vunpack.c.l.b16 %v142
    %v448 = vunpack.c.h.b16 %v142
    %v449 = vunpack.c.l.b16 %v143
    %v450 = vunpack.c.h.b16 %v143
    %v451 = vunpack.c.l.b16 %v144
    %v452 = vunpack.c.h.b16 %v144
    %v453 = vunpack.c.l.b16 %v145
    %v454 = vunpack.c.h.b16 %v145
    %v455 = vunpack.c.l.b16 %v146
    %v456 = vunpack.c.h.b16 %v146
    %v457 = vunpack.c.l.b16 %v147
    %v458 = vunpack.c.h.b16 %v147
    %v459 = vunpack.c.l.b16 %v148
    %v460 = vunpack.c.h.b16 %v148
    %v461 = vunpack.c.l.b16 %v149
    %v462 = vunpack.c.h.b16 %v149
    %v463 = vunpack.c.l.b16 %v150
    %v464 = vunpack.c.h.b16 %v150
    %v465 = vunpack.c.l.b16 %v151
    %v466 = vunpack.c.h.b16 %v151
    %v467 = vunpack.c.l.b16 %v152
    %v468 = vunpack.c.h.b16 %v152
    %v469 = vunpack.c.l.b16 %v153
    %v470 = vunpack.c.h.b16 %v153
    %v471 = vunpack.c.l.b16 %v154
    %v472 = vunpack.c.h.b16 %v154
    %v473 = vunpack.c.l.b16 %v155
    %v474 = vunpack.c.h.b16 %v155
    %v475 = vunpack.c.l.b16 %v156
    %v476 = vunpack.c.h.b16 %v156
    %v477 = vunpack.c.l.b16 %v157
    %v478 = vunpack.c.h.b16 %v157
    %v479 = vunpack.c.l.b16 %v158
    %v480 = vunpack.c.h.b16 %v158
    %v481 = vunpack.c.l.b16 %v159
    %v482 = vunpack.c.h.b16 %v159
    %v483 = vunpack.c.l.b16 %v160
    %v484 = vunpack.c.h.b16 %v160
    %v485 = vunpack.c.l.b16 %v161
    %v486 = vunpack.c.h.b16 %v161
    %v487 = vunpack.c.l.b16 %v162
    %v488 = vunpack.c.h.b16 %v162
    %v489 = vunpack.c.l.b16 %v163
    %v490 = vunpack.c.h.b16 %v163
    %v491 = vunpack.c.l.b16 %v164
    %v492 = vunpack.c.h.b16 %v164
    %v493 = vunpack.c.l.b16 %v165
    %v494 = vunpack.c.h.b16 %v165
    %v495 = vunpack.c.l.b16 %v166
    %v496 = vunpack.c.h.b16 %v166
    %v497 = vunpack.c.l.b16 %v167
    %v498 = vunpack.c.h.b16 %v167
    %v499 = vunpack.c.l.b16 %v168
    %v500 = vunpack.c.h.b16 %v168
    %v501 = vunpack.c.l.b16 %v169
    %v502 = vunpack.c.h.b16 %v169
    %v503 = vunpack.c.l.b16 %v170
    %v504 = vunpack.c.h.b16 %v170
    %v505 = vunpack.c.l.b16 %v171
    %v506 = vunpack.c.h.b16 %v171
    %v507 = vunpack.c.l.b16 %v172
    %v508 = vunpack.c.h.b16 %v172
    %v509 = vunpack.c.l.b16 %v173
    %v510 = vunpack.c.h.b16 %v173
    %v511 = vunpack.c.l.b16 %v174
    %v512 = vunpack.c.h.b16 %v174
    %v513 = vunpack.c.l.b16 %v175
    %v514 = vunpack.c.h.b16 %v175
    %v515 = vunpack.c.l.b16 %v176
    %v516 = vunpack.c.h.b16 %v176
    %v517 = vunpack.c.l.b16 %v177
    %v518 = vunpack.c.h.b16 %v177
    %v519 = vunpack.c.l.b16 %v178
    %v520 = vunpack.c.h.b16 %v178
    %v521 = vunpack.c.l.b16 %v179
    %v522 = vunpack.c.h.b16 %v179
    %v523 = vunpack.c.l.b16 %v180
    %v524 = vunpack.c.h.b16 %v180
    %v525 = vunpack.c.l.b16 %v181
    %v526 = vunpack.c.h.b16 %v181
    %v527 = vunpack.c.l.b16 %v182
    %v528 = vunpack.c.h.b16 %v182
    %v529 = vunpack.c.l.b16 %v183
    %v530 = vunpack.c.h.b16 %v183
    %v531 = vunpack.c.l.b16 %v184
    %v532 = vunpack.c.h.b16 %v184
    %v533 = vunpack.c.l.b16 %v185
    %v534 = vunpack.c.h.b16 %v185
    %v535 = vunpack.c.l.b16 %v186
    %v536 = vunpack.c.h.b16 %v186
    %v537 = vunpack.c.l.b16 %v187
    %v538 = vunpack.c.h.b16 %v187
    %v539 = vunpack.c.l.b16 %v188
    %v540 = vunpack.c.h.b16 %v188
    %v541 = vunpack.c.l.b16 %v189
    %v542 = vunpack.c.h.b16 %v189
    %v543 = vunpack.c.l.b16 %v190
    %v544 = vunpack.c.h.b16 %v190
    %v545 = vunpack.c.l.b16 %v191
    %v546 = vunpack.c.h.b16 %v191
    %v547 = vunpack.c.l.b16 %v192
    %v548 = vunpack.c.h.b16 %v192
    %v549 = vunpack.c.l.b16 %v193
    %v550 = vunpack.c.h.b16 %v193
    %v551 = vunpack.c.l.b16 %v194
    %v552 = vunpack.c.h.b16 %v194
    %v553 = vunpack.c.l.b16 %v195
    %v554 = vunpack.c.h.b16 %v195
    %v555 = vunpack.c.l.b16 %v196
    %v556 = vunpack.c.h.b16 %v196
    %v557 = vunpack.c.l.b16 %v197
    %v558 = vunpack.c.h.b16 %v197
    %v559 = vunpack.c.l.b16 %v198
    %v560 = vunpack.c.h.b16 %v198
    %v561 = vunpack.c.l.b16 %v199
    %v562 = vunpack.c.h.b16 %v199
    %v563 = vunpack.c.l.b16 %v200
    %v564 = vunpack.c.h.b16 %v200
    %v565 = vunpack.c.l.b16 %v201
    %v566 = vunpack.c.h.b16 %v201
    %v567 = vunpack.c.l.b16 %v202
    %v568 = vunpack.c.h.b16 %v202
    %v569 = vunpack.c.l.b16 %v203
    %v570 = vunpack.c.h.b16 %v203
    %v571 = vunpack.c.l.b16 %v204
    %v572 = vunpack.c.h.b16 %v204
    %v573 = vunpack.c.l.b16 %v205
    %v574 = vunpack.c.h.b16 %v205
    %v575 = vunpack.c.l.b16 %v206
    %v576 = vunpack.c.h.b16 %v206
    %v577 = vunpack.c.l.b16 %v207
    %v578 = vunpack.c.h.b16 %v207
    %v579 = vunpack.c.l.b16 %v208
    %v580 = vunpack.c.h.b16 %v208
    %v581 = vunpack.c.l.b16 %v209
    %v582 = vunpack.c.h.b16 %v209
    %v583 = vunpack.c.l.b16 %v210
    %v584 = vunpack.c.h.b16 %v210
    %v585 = vunpack.c.l.b16 %v211
    %v586 = vunpack.c.h.b16 %v211
    %v587 = vunpack.c.l.b16 %v212
    %v588 = vunpack.c.h.b16 %v212
    %v589 = vunpack.c.l.b16 %v213
    %v590 = vunpack.c.h.b16 %v213
    %v591 = vunpack.c.l.b16 %v214
    %v592 = vunpack.c.h.b16 %v214
    %v593 = vunpack.c.l.b16 %v215
    %v594 = vunpack.c.h.b16 %v215
    %v595 = vunpack.c.l.b16 %v216
    %v596 = vunpack.c.h.b16 %v216
    %v597 = vunpack.c.l.b16 %v217
    %v598 = vunpack.c.h.b16 %v217
    %v599 = vunpack.c.l.b16 %v218
    %v600 = vunpack.c.h.b16 %v218
    %v601 = vunpack.c.l.b16 %v219
    %v602 = vunpack.c.h.b16 %v219
    %v603 = vunpack.c.l.b16 %v220
    %v604 = vunpack.c.h.b16 %v220
    %v605 = vunpack.c.l.b16 %v221
    %v606 = vunpack.c.h.b16 %v221
    %v607 = vunpack.c.l.b16 %v222
    %v608 = vunpack.c.h.b16 %v222
    %v609 = vunpack.c.l.b16 %v223
    %v610 = vunpack.c.h.b16 %v223
    %v611 = vunpack.c.l.b16 %v224
    %v612 = vunpack.c.h.b16 %v224
    %v613 = vunpack.c.l.b16 %v225
    %v614 = vunpack.c.h.b16 %v225
    %v615 = vunpack.c.l.b16 %v226
    %v616 = vunpack.c.h.b16 %v226
    %v617 = vunpack.c.l.b16 %v227
    %v618 = vunpack.c.h.b16 %v227
    %v619 = vunpack.c.l.b16 %v228
    %v620 = vunpack.c.h.b16 %v228
    %v621 = vunpack.c.l.b16 %v229
    %v622 = vunpack.c.h.b16 %v229
    %v623 = vunpack.c.l.b16 %v230
    %v624 = vunpack.c.h.b16 %v230
    %v625 = vpack.c.b16 %v373, %v369
    %v626 = vpack.c.b16 %v374, %v370
    %v627 = vpack.c.b16 %v375, %v371
    %v628 = vpack.c.b16 %v376, %v372
    %v629 = vpack.c.b16 %v381, %v377
    %v630 = vpack.c.b16 %v382, %v378
    %v631 = vpack.c.b16 %v383, %v379
    %v632 = vpack.c.b16 %v384, %v380
    %v633 = vpack.c.b16 %v389, %v385
    %v634 = vpack.c.b16 %v390, %v386
    %v635 = vpack.c.b16 %v391, %v387
    %v636 = vpack.c.b16 %v392, %v388
    %v637 = vpack.c.b16 %v397, %v393
    %v638 = vpack.c.b16 %v398, %v394
    %v639 = vpack.c.b16 %v399, %v395
    %v640 = vpack.c.b16 %v400, %v396
    %v641 = vpack.c.b16 %v405, %v401
    %v642 = vpack.c.b16 %v406, %v402
    %v643 = vpack.c.b16 %v407, %v403
    %v644 = vpack.c.b16 %v408, %v404
    %v645 = vpack.c.b16 %v413, %v409
    %v646 = vpack.c.b16 %v414, %v410
    %v647 = vpack.c.b16 %v415, %v411
    %v648 = vpack.c.b16 %v416, %v412
    %v649 = vpack.c.b16 %v421, %v417
    %v650 = vpack.c.b16 %v422, %v418
    %v651 = vpack.c.b16 %v423, %v419
    %v652 = vpack.c.b16 %v424, %v420
    %v653 = vpack.c.b16 %v429, %v425
    %v654 = vpack.c.b16 %v430, %v426
    %v655 = vpack.c.b16 %v431, %v427
    %v656 = vpack.c.b16 %v432, %v428
    %v657 = vpack.c.b16 %v437, %v433
    %v658 = vpack.c.b16 %v438, %v434
    %v659 = vpack.c.b16 %v439, %v435
    %v660 = vpack.c.b16 %v440, %v436
    %v661 = vpack.c.b16 %v445, %v441
    %v662 = vpack.c.b16 %v446, %v442
    %v663 = vpack.c.b16 %v447, %v443
    %v664 = vpack.c.b16 %v448, %v444
    %v665 = vpack.c.b16 %v453, %v449
    %v666 = vpack.c.b16 %v454, %v450
    %v667 = vpack.c.b16 %v455, %v451
    %v668 = vpack.c.b16 %v456, %v452
    %v669 = vpack.c.b16 %v461, %v457
    %v670 = vpack.c.b16 %v462, %v458
    %v671 = vpack.c.b16 %v463, %v459
    %v672 = vpack.c.b16 %v464, %v460
    %v673 = vpack.c.b16 %v469, %v465
    %v674 = vpack.c.b16 %v470, %v466
    %v675 = vpack.c.b16 %v471, %v467
    %v676 = vpack.c.b16 %v472, %v468
    %v677 = vpack.c.b16 %v477, %v473
    %v678 = vpack.c.b16 %v478, %v474
    %v679 = vpack.c.b16 %v479, %v475
    %v680 = vpack.c.b16 %v480, %v476
    %v681 = vpack.c.b16 %v485, %v481
    %v682 = vpack.c.b16 %v486, %v482
    %v683 = vpack.c.b16 %v487, %v483
    %v684 = vpack.c.b16 %v488, %v484
    %v685 = vpack.c.b16 %v493, %v489
    %v686 = vpack.c.b16 %v494, %v490
    %v687 = vpack.c.b16 %v495, %v491
    %v688 = vpack.c.b16 %v496, %v492
    %v689 = vpack.c.b16 %v501, %v497
    %v690 = vpack.c.b16 %v502, %v498
    %v691 = vpack.c.b16 %v503, %v499
    %v692 = vpack.c.b16 %v504, %v500
    %v693 = vpack.c.b16 %v509, %v505
    %v694 = vpack.c.b16 %v510, %v506
    %v695 = vpack.c.b16 %v511, %v507
    %v696 = vpack.c.b16 %v512, %v508
    %v697 = vpack.c.b16 %v517, %v513
    %v698 = vpack.c.b16 %v518, %v514
    %v699 = vpack.c.b16 %v519, %v515
    %v700 = vpack.c.b16 %v520, %v516
    %v701 = vpack.c.b16 %v525, %v521
    %v702 = vpack.c.b16 %v526, %v522
    %v703 = vpack.c.b16 %v527, %v523
    %v704 = vpack.c.b16 %v528, %v524
    %v705 = vpack.c.b16 %v533, %v529
    %v706 = vpack.c.b16 %v534, %v530
    %v707 = vpack.c.b16 %v535, %v531
    %v708 = vpack.c.b16 %v536, %v532
    %v709 = vpack.c.b16 %v541, %v537
    %v710 = vpack.c.b16 %v542, %v538
    %v711 = vpack.c.b16 %v543, %v539
    %v712 = vpack.c.b16 %v544, %v540
    %v713 = vpack.c.b16 %v549, %v545
    %v714 = vpack.c.b16 %v550, %v546
    %v715 = vpack.c.b16 %v551, %v547
    %v716 = vpack.c.b16 %v552, %v548
    %v717 = vpack.c.b16 %v557, %v553
    %v718 = vpack.c.b16 %v558, %v554
    %v719 = vpack.c.b16 %v559, %v555
    %v720 = vpack.c.b16 %v560, %v556
    %v721 = vpack.c.b16 %v565, %v561
    %v722 = vpack.c.b16 %v566, %v562
    %v723 = vpack.c.b16 %v567, %v563
    %v724 = vpack.c.b16 %v568, %v564
    %v725 = vpack.c.b16 %v573, %v569
    %v726 = vpack.c.b16 %v574, %v570
    %v727 = vpack.c.b16 %v575, %v571
    %v728 = vpack.c.b16 %v576, %v572
    %v729 = vpack.c.b16 %v581, %v577
    %v730 = vpack.c.b16 %v582, %v578
    %v731 = vpack.c.b16 %v583, %v579
    %v732 = vpack.c.b16 %v584, %v580
    %v733 = vpack.c.b16 %v589, %v585
    %v734 = vpack.c.b16 %v590, %v586
    %v735 = vpack.c.b16 %v591, %v587
    %v736 = vpack.c.b16 %v592, %v588
    %v737 = vpack.c.b16 %v597, %v593
    %v738 = vpack.c.b16 %v598, %v594
    %v739 = vpack.c.b16 %v599, %v595
    %v740 = vpack.c.b16 %v600, %v596
    %v741 = vpack.c.b16 %v605, %v601
    %v742 = vpack.c.b16 %v606, %v602
    %v743 = vpack.c.b16 %v607, %v603
    %v744 = vpack.c.b16 %v608, %v604
    %v745 = vpack.c.b16 %v613, %v609
    %v746 = vpack.c.b16 %v614, %v610
    %v747 = vpack.c.b16 %v615, %v611
    %v748 = vpack.c.b16 %v616, %v612
    %v749 = vpack.c.b16 %v621, %v617
    %v750 = vpack.c.b16 %v622, %v618
    %v751 = vpack.c.b16 %v623, %v619
    %v752 = vpack.c.b16 %v624, %v620
    %881 = vmatpush.bf16.msra.mxu0 %v653
    %882 = vmatpush.bf16.msra.mxu0 %v649
    %883 = vmatpush.bf16.msra.mxu0 %v645
    %884 = vmatpush.bf16.msra.mxu0 %v641
    %885 = vmatpush.bf16.msra.mxu0 %v637
    %886 = vmatpush.bf16.msra.mxu0 %v633
    %887 = vmatpush.bf16.msra.mxu0 %v629
    %888 = vmatpush.bf16.msra.mxu0 %v625
    %889 = vmatmul.bf16.gmra.mxu0 %v99
    %v890 = vpop.f32.mrf.mxu0
    %v891 = vadd.f32 %v233, %v890
    %v892 = vpop.f32.mrf.mxu0
    %893 = vdwg.mxu0
    %894 = vmatpush.bf16.msra.mxu0 %v685
    %895 = vmatpush.bf16.msra.mxu0 %v681
    %896 = vmatpush.bf16.msra.mxu0 %v677
    %897 = vmatpush.bf16.msra.mxu0 %v673
    %898 = vmatpush.bf16.msra.mxu0 %v669
    %899 = vmatpush.bf16.msra.mxu0 %v665
    %900 = vmatpush.bf16.msra.mxu0 %v661
    %901 = vmatpush.bf16.msra.mxu0 %v657
    %902 = vmatmul.bf16.gmra.mxu0 %v100
    %v903 = vpop.f32.mrf.mxu0
    %v904 = vadd.f32 %v891, %v903
    %v905 = vpop.f32.mrf.mxu0
    %906 = vdwg.mxu0
    %907 = vmatpush.bf16.msra.mxu0 %v717
    %908 = vmatpush.bf16.msra.mxu0 %v713
    %909 = vmatpush.bf16.msra.mxu0 %v709
    %910 = vmatpush.bf16.msra.mxu0 %v705
    %911 = vmatpush.bf16.msra.mxu0 %v701
    %912 = vmatpush.bf16.msra.mxu0 %v697
    %913 = vmatpush.bf16.msra.mxu0 %v693
    %914 = vmatpush.bf16.msra.mxu0 %v689
    %915 = vmatmul.bf16.gmra.mxu0 %v101
    %v916 = vpop.f32.mrf.mxu0
    %v917 = vadd.f32 %v904, %v916
    %v918 = vpop.f32.mrf.mxu0
    %919 = vdwg.mxu0
    %920 = vmatpush.bf16.msra.mxu0 %v749
    %921 = vmatpush.bf16.msra.mxu0 %v745
    %922 = vmatpush.bf16.msra.mxu0 %v741
    %923 = vmatpush.bf16.msra.mxu0 %v737
    %924 = vmatpush.bf16.msra.mxu0 %v733
    %925 = vmatpush.bf16.msra.mxu0 %v729
    %926 = vmatpush.bf16.msra.mxu0 %v725
    %927 = vmatpush.bf16.msra.mxu0 %v721
    %928 = vmatmul.bf16.gmra.mxu0 %v102
    %v929 = vpop.f32.mrf.mxu0
    %v930 = vadd.f32 %v917, %v929
    %v931 = vpop.f32.mrf.mxu0
    %932 = vdwg.mxu0
    %933 = vmatpush.bf16.msra.mxu0 %v654
    %934 = vmatpush.bf16.msra.mxu0 %v650
    %935 = vmatpush.bf16.msra.mxu0 %v646
    %936 = vmatpush.bf16.msra.mxu0 %v642
    %937 = vmatpush.bf16.msra.mxu0 %v638
    %938 = vmatpush.bf16.msra.mxu0 %v634
    %939 = vmatpush.bf16.msra.mxu0 %v630
    %940 = vmatpush.bf16.msra.mxu0 %v626
    %941 = vmatmul.bf16.gmra.mxu0 %v99
    %v942 = vpop.f32.mrf.mxu0
    %v943 = vadd.f32 %v234, %v942
    %v944 = vpop.f32.mrf.mxu0
    %945 = vdwg.mxu0
    %946 = vmatpush.bf16.msra.mxu0 %v686
    %947 = vmatpush.bf16.msra.mxu0 %v682
    %948 = vmatpush.bf16.msra.mxu0 %v678
    %949 = vmatpush.bf16.msra.mxu0 %v674
    %950 = vmatpush.bf16.msra.mxu0 %v670
    %951 = vmatpush.bf16.msra.mxu0 %v666
    %952 = vmatpush.bf16.msra.mxu0 %v662
    %953 = vmatpush.bf16.msra.mxu0 %v658
    %954 = vmatmul.bf16.gmra.mxu0 %v100
    %v955 = vpop.f32.mrf.mxu0
    %v956 = vadd.f32 %v943, %v955
    %v957 = vpop.f32.mrf.mxu0
    %958 = vdwg.mxu0
    %959 = vmatpush.bf16.msra.mxu0 %v718
    %960 = vmatpush.bf16.msra.mxu0 %v714
    %961 = vmatpush.bf16.msra.mxu0 %v710
    %962 = vmatpush.bf16.msra.mxu0 %v706
    %963 = vmatpush.bf16.msra.mxu0 %v702
    %964 = vmatpush.bf16.msra.mxu0 %v698
    %965 = vmatpush.bf16.msra.mxu0 %v694
    %966 = vmatpush.bf16.msra.mxu0 %v690
    %967 = vmatmul.bf16.gmra.mxu0 %v101
    %v968 = vpop.f32.mrf.mxu0
    %v969 = vadd.f32 %v956, %v968
    %v970 = vpop.f32.mrf.mxu0
    %971 = vdwg.mxu0
    %972 = vmatpush.bf16.msra.mxu0 %v750
    %973 = vmatpush.bf16.msra.mxu0 %v746
    %974 = vmatpush.bf16.msra.mxu0 %v742
    %975 = vmatpush.bf16.msra.mxu0 %v738
    %976 = vmatpush.bf16.msra.mxu0 %v734
    %977 = vmatpush.bf16.msra.mxu0 %v730
    %978 = vmatpush.bf16.msra.mxu0 %v726
    %979 = vmatpush.bf16.msra.mxu0 %v722
    %980 = vmatmul.bf16.gmra.mxu0 %v102
    %v981 = vpop.f32.mrf.mxu0
    %v982 = vadd.f32 %v969, %v981
    %v983 = vpop.f32.mrf.mxu0
    %984 = vdwg.mxu0
    %985 = vmatpush.bf16.msra.mxu0 %v655
    %986 = vmatpush.bf16.msra.mxu0 %v651
    %987 = vmatpush.bf16.msra.mxu0 %v647
    %988 = vmatpush.bf16.msra.mxu0 %v643
    %989 = vmatpush.bf16.msra.mxu0 %v639
    %990 = vmatpush.bf16.msra.mxu0 %v635
    %991 = vmatpush.bf16.msra.mxu0 %v631
    %992 = vmatpush.bf16.msra.mxu0 %v627
    %993 = vmatmul.bf16.gmra.mxu0 %v99
    %v994 = vpop.f32.mrf.mxu0
    %v995 = vadd.f32 %v235, %v994
    %v996 = vpop.f32.mrf.mxu0
    %997 = vdwg.mxu0
    %998 = vmatpush.bf16.msra.mxu0 %v687
    %999 = vmatpush.bf16.msra.mxu0 %v683
    %1000 = vmatpush.bf16.msra.mxu0 %v679
    %1001 = vmatpush.bf16.msra.mxu0 %v675
    %1002 = vmatpush.bf16.msra.mxu0 %v671
    %1003 = vmatpush.bf16.msra.mxu0 %v667
    %1004 = vmatpush.bf16.msra.mxu0 %v663
    %1005 = vmatpush.bf16.msra.mxu0 %v659
    %1006 = vmatmul.bf16.gmra.mxu0 %v100
    %v1007 = vpop.f32.mrf.mxu0
    %v1008 = vadd.f32 %v995, %v1007
    %v1009 = vpop.f32.mrf.mxu0
    %1010 = vdwg.mxu0
    %1011 = vmatpush.bf16.msra.mxu0 %v719
    %1012 = vmatpush.bf16.msra.mxu0 %v715
    %1013 = vmatpush.bf16.msra.mxu0 %v711
    %1014 = vmatpush.bf16.msra.mxu0 %v707
    %1015 = vmatpush.bf16.msra.mxu0 %v703
    %1016 = vmatpush.bf16.msra.mxu0 %v699
    %1017 = vmatpush.bf16.msra.mxu0 %v695
    %1018 = vmatpush.bf16.msra.mxu0 %v691
    %1019 = vmatmul.bf16.gmra.mxu0 %v101
    %v1020 = vpop.f32.mrf.mxu0
    %v1021 = vadd.f32 %v1008, %v1020
    %v1022 = vpop.f32.mrf.mxu0
    %1023 = vdwg.mxu0
    %1024 = vmatpush.bf16.msra.mxu0 %v751
    %1025 = vmatpush.bf16.msra.mxu0 %v747
    %1026 = vmatpush.bf16.msra.mxu0 %v743
    %1027 = vmatpush.bf16.msra.mxu0 %v739
    %1028 = vmatpush.bf16.msra.mxu0 %v735
    %1029 = vmatpush.bf16.msra.mxu0 %v731
    %1030 = vmatpush.bf16.msra.mxu0 %v727
    %1031 = vmatpush.bf16.msra.mxu0 %v723
    %1032 = vmatmul.bf16.gmra.mxu0 %v102
    %v1033 = vpop.f32.mrf.mxu0
    %v1034 = vadd.f32 %v1021, %v1033
    %v1035 = vpop.f32.mrf.mxu0
    %1036 = vdwg.mxu0
    %1037 = vmatpush.bf16.msra.mxu0 %v656
    %1038 = vmatpush.bf16.msra.mxu0 %v652
    %1039 = vmatpush.bf16.msra.mxu0 %v648
    %1040 = vmatpush.bf16.msra.mxu0 %v644
    %1041 = vmatpush.bf16.msra.mxu0 %v640
    %1042 = vmatpush.bf16.msra.mxu0 %v636
    %1043 = vmatpush.bf16.msra.mxu0 %v632
    %1044 = vmatpush.bf16.msra.mxu0 %v628
    %1045 = vmatmul.bf16.gmra.mxu0 %v99
    %v1046 = vpop.f32.mrf.mxu0
    %v1047 = vadd.f32 %v236, %v1046
    %v1048 = vpop.f32.mrf.mxu0
    %1049 = vdwg.mxu0
    %1050 = vmatpush.bf16.msra.mxu0 %v688
    %1051 = vmatpush.bf16.msra.mxu0 %v684
    %1052 = vmatpush.bf16.msra.mxu0 %v680
    %1053 = vmatpush.bf16.msra.mxu0 %v676
    %1054 = vmatpush.bf16.msra.mxu0 %v672
    %1055 = vmatpush.bf16.msra.mxu0 %v668
    %1056 = vmatpush.bf16.msra.mxu0 %v664
    %1057 = vmatpush.bf16.msra.mxu0 %v660
    %1058 = vmatmul.bf16.gmra.mxu0 %v100
    %v1059 = vpop.f32.mrf.mxu0
    %v1060 = vadd.f32 %v1047, %v1059
    %v1061 = vpop.f32.mrf.mxu0
    %1062 = vdwg.mxu0
    %1063 = vmatpush.bf16.msra.mxu0 %v720
    %1064 = vmatpush.bf16.msra.mxu0 %v716
    %1065 = vmatpush.bf16.msra.mxu0 %v712
    %1066 = vmatpush.bf16.msra.mxu0 %v708
    %1067 = vmatpush.bf16.msra.mxu0 %v704
    %1068 = vmatpush.bf16.msra.mxu0 %v700
    %1069 = vmatpush.bf16.msra.mxu0 %v696
    %1070 = vmatpush.bf16.msra.mxu0 %v692
    %1071 = vmatmul.bf16.gmra.mxu0 %v101
    %v1072 = vpop.f32.mrf.mxu0
    %v1073 = vadd.f32 %v1060, %v1072
    %v1074 = vpop.f32.mrf.mxu0
    %1075 = vdwg.mxu0
    %1076 = vmatpush.bf16.msra.mxu0 %v752
    %1077 = vmatpush.bf16.msra.mxu0 %v748
    %1078 = vmatpush.bf16.msra.mxu0 %v744
    %1079 = vmatpush.bf16.msra.mxu0 %v740
    %1080 = vmatpush.bf16.msra.mxu0 %v736
    %1081 = vmatpush.bf16.msra.mxu0 %v732
    %1082 = vmatpush.bf16.msra.mxu0 %v728
    %1083 = vmatpush.bf16.msra.mxu0 %v724
    %1084 = vmatmul.bf16.gmra.mxu0 %v102
    %v1085 = vpop.f32.mrf.mxu0
    %v1086 = vadd.f32 %v1073, %v1085
    %v1087 = vpop.f32.mrf.mxu0
    %1088 = vdwg.mxu0
    %v1089 = vpack.c.bf16 %v982, %v930
    %v1090 = vpack.c.bf16 %v1086, %v1034
    %v1091 = vunpack.c.l.bf16 %v1089
    %v1092 = vunpack.c.h.bf16 %v1089
    %v1093 = vunpack.c.l.bf16 %v1090
    %v1094 = vunpack.c.h.bf16 %v1090
    %v1095 = vmax.f32 %v1091, 0.0
    %v1096 = vmax.f32 %v1092, 0.0
    %v1097 = vmax.f32 %v1093, 0.0
    %v1098 = vmax.f32 %v1094, 0.0
    %v1099 = vpack.c.bf16 %v1095, %v1095
    %v1100 = vpack.c.bf16 %v1096, %v1096
    %v1101 = vpack.c.bf16 %v1097, %v1097
    %v1102 = vpack.c.bf16 %v1098, %v1098
    %v1103 = vld [vmem:[#allocation4] sm:$0xff]
    %v1104 = vld [vmem:[#allocation4 + $0x8] sm:$0xff]
    %v1105 = vld [vmem:[#allocation4 + $0x10] sm:$0xff]
    %v1106 = vld [vmem:[#allocation4 + $0x18] sm:$0xff]
    %v1107 = vld [vmem:[#allocation4 + $0x20] sm:$0xff]
    %v1108 = vld [vmem:[#allocation4 + $0x28] sm:$0xff]
    %v1109 = vld [vmem:[#allocation4 + $0x30] sm:$0xff]
    %v1110 = vld [vmem:[#allocation4 + $0x38] sm:$0xff]
    %v1111 = vld [vmem:[#allocation4 + $0x40] sm:$0xff]
    %v1112 = vld [vmem:[#allocation4 + $0x48] sm:$0xff]
    %v1113 = vld [vmem:[#allocation4 + $0x50] sm:$0xff]
    %v1114 = vld [vmem:[#allocation4 + $0x58] sm:$0xff]
    %v1115 = vld [vmem:[#allocation4 + $0x60] sm:$0xff]
    %v1116 = vld [vmem:[#allocation4 + $0x68] sm:$0xff]
    %v1117 = vld [vmem:[#allocation4 + $0x70] sm:$0xff]
    %v1118 = vld [vmem:[#allocation4 + $0x78] sm:$0xff]
    %v1119 = vld [vmem:[#allocation4 + $0x80] sm:$0xff]
    %v1120 = vld [vmem:[#allocation4 + $0x88] sm:$0xff]
    %v1121 = vld [vmem:[#allocation4 + $0x90] sm:$0xff]
    %v1122 = vld [vmem:[#allocation4 + $0x98] sm:$0xff]
    %v1123 = vld [vmem:[#allocation4 + $0xa0] sm:$0xff]
    %v1124 = vld [vmem:[#allocation4 + $0xa8] sm:$0xff]
    %v1125 = vld [vmem:[#allocation4 + $0xb0] sm:$0xff]
    %v1126 = vld [vmem:[#allocation4 + $0xb8] sm:$0xff]
    %v1127 = vld [vmem:[#allocation4 + $0xc0] sm:$0xff]
    %v1128 = vld [vmem:[#allocation4 + $0xc8] sm:$0xff]
    %v1129 = vld [vmem:[#allocation4 + $0xd0] sm:$0xff]
    %v1130 = vld [vmem:[#allocation4 + $0xd8] sm:$0xff]
    %v1131 = vld [vmem:[#allocation4 + $0xe0] sm:$0xff]
    %v1132 = vld [vmem:[#allocation4 + $0xe8] sm:$0xff]
    %v1133 = vld [vmem:[#allocation4 + $0xf0] sm:$0xff]
    %v1134 = vld [vmem:[#allocation4 + $0xf8] sm:$0xff]
    %v1135 = vld [vmem:[#allocation4 + $0x100] sm:$0xff]
    %v1136 = vld [vmem:[#allocation4 + $0x108] sm:$0xff]
    %v1137 = vld [vmem:[#allocation4 + $0x110] sm:$0xff]
    %v1138 = vld [vmem:[#allocation4 + $0x118] sm:$0xff]
    %v1139 = vld [vmem:[#allocation4 + $0x120] sm:$0xff]
    %v1140 = vld [vmem:[#allocation4 + $0x128] sm:$0xff]
    %v1141 = vld [vmem:[#allocation4 + $0x130] sm:$0xff]
    %v1142 = vld [vmem:[#allocation4 + $0x138] sm:$0xff]
    %v1143 = vld [vmem:[#allocation4 + $0x140] sm:$0xff]
    %v1144 = vld [vmem:[#allocation4 + $0x148] sm:$0xff]
    %v1145 = vld [vmem:[#allocation4 + $0x150] sm:$0xff]
    %v1146 = vld [vmem:[#allocation4 + $0x158] sm:$0xff]
    %v1147 = vld [vmem:[#allocation4 + $0x160] sm:$0xff]
    %v1148 = vld [vmem:[#allocation4 + $0x168] sm:$0xff]
    %v1149 = vld [vmem:[#allocation4 + $0x170] sm:$0xff]
    %v1150 = vld [vmem:[#allocation4 + $0x178] sm:$0xff]
    %v1151 = vld [vmem:[#allocation4 + $0x180] sm:$0xff]
    %v1152 = vld [vmem:[#allocation4 + $0x188] sm:$0xff]
    %v1153 = vld [vmem:[#allocation4 + $0x190] sm:$0xff]
    %v1154 = vld [vmem:[#allocation4 + $0x198] sm:$0xff]
    %v1155 = vld [vmem:[#allocation4 + $0x1a0] sm:$0xff]
    %v1156 = vld [vmem:[#allocation4 + $0x1a8] sm:$0xff]
    %v1157 = vld [vmem:[#allocation4 + $0x1b0] sm:$0xff]
    %v1158 = vld [vmem:[#allocation4 + $0x1b8] sm:$0xff]
    %v1159 = vld [vmem:[#allocation4 + $0x1c0] sm:$0xff]
    %v1160 = vld [vmem:[#allocation4 + $0x1c8] sm:$0xff]
    %v1161 = vld [vmem:[#allocation4 + $0x1d0] sm:$0xff]
    %v1162 = vld [vmem:[#allocation4 + $0x1d8] sm:$0xff]
    %v1163 = vld [vmem:[#allocation4 + $0x1e0] sm:$0xff]
    %v1164 = vld [vmem:[#allocation4 + $0x1e8] sm:$0xff]
    %v1165 = vld [vmem:[#allocation4 + $0x1f0] sm:$0xff]
    %v1166 = vld [vmem:[#allocation4 + $0x1f8] sm:$0xff]
    %v1167 = vld [vmem:[#allocation4 + $0x200] sm:$0xff]
    %v1168 = vld [vmem:[#allocation4 + $0x208] sm:$0xff]
    %v1169 = vld [vmem:[#allocation4 + $0x210] sm:$0xff]
    %v1170 = vld [vmem:[#allocation4 + $0x218] sm:$0xff]
    %v1171 = vld [vmem:[#allocation4 + $0x220] sm:$0xff]
    %v1172 = vld [vmem:[#allocation4 + $0x228] sm:$0xff]
    %v1173 = vld [vmem:[#allocation4 + $0x230] sm:$0xff]
    %v1174 = vld [vmem:[#allocation4 + $0x238] sm:$0xff]
    %v1175 = vld [vmem:[#allocation4 + $0x240] sm:$0xff]
    %v1176 = vld [vmem:[#allocation4 + $0x248] sm:$0xff]
    %v1177 = vld [vmem:[#allocation4 + $0x250] sm:$0xff]
    %v1178 = vld [vmem:[#allocation4 + $0x258] sm:$0xff]
    %v1179 = vld [vmem:[#allocation4 + $0x260] sm:$0xff]
    %v1180 = vld [vmem:[#allocation4 + $0x268] sm:$0xff]
    %v1181 = vld [vmem:[#allocation4 + $0x270] sm:$0xff]
    %v1182 = vld [vmem:[#allocation4 + $0x278] sm:$0xff]
    %v1183 = vld [vmem:[#allocation4 + $0x280] sm:$0xff]
    %v1184 = vld [vmem:[#allocation4 + $0x288] sm:$0xff]
    %v1185 = vld [vmem:[#allocation4 + $0x290] sm:$0xff]
    %v1186 = vld [vmem:[#allocation4 + $0x298] sm:$0xff]
    %v1187 = vld [vmem:[#allocation4 + $0x2a0] sm:$0xff]
    %v1188 = vld [vmem:[#allocation4 + $0x2a8] sm:$0xff]
    %v1189 = vld [vmem:[#allocation4 + $0x2b0] sm:$0xff]
    %v1190 = vld [vmem:[#allocation4 + $0x2b8] sm:$0xff]
    %v1191 = vld [vmem:[#allocation4 + $0x2c0] sm:$0xff]
    %v1192 = vld [vmem:[#allocation4 + $0x2c8] sm:$0xff]
    %v1193 = vld [vmem:[#allocation4 + $0x2d0] sm:$0xff]
    %v1194 = vld [vmem:[#allocation4 + $0x2d8] sm:$0xff]
    %v1195 = vld [vmem:[#allocation4 + $0x2e0] sm:$0xff]
    %v1196 = vld [vmem:[#allocation4 + $0x2e8] sm:$0xff]
    %v1197 = vld [vmem:[#allocation4 + $0x2f0] sm:$0xff]
    %v1198 = vld [vmem:[#allocation4 + $0x2f8] sm:$0xff]
    %v1199 = vld [vmem:[#allocation4 + $0x300] sm:$0xff]
    %v1200 = vld [vmem:[#allocation4 + $0x308] sm:$0xff]
    %v1201 = vld [vmem:[#allocation4 + $0x310] sm:$0xff]
    %v1202 = vld [vmem:[#allocation4 + $0x318] sm:$0xff]
    %v1203 = vld [vmem:[#allocation4 + $0x320] sm:$0xff]
    %v1204 = vld [vmem:[#allocation4 + $0x328] sm:$0xff]
    %v1205 = vld [vmem:[#allocation4 + $0x330] sm:$0xff]
    %v1206 = vld [vmem:[#allocation4 + $0x338] sm:$0xff]
    %v1207 = vld [vmem:[#allocation4 + $0x340] sm:$0xff]
    %v1208 = vld [vmem:[#allocation4 + $0x348] sm:$0xff]
    %v1209 = vld [vmem:[#allocation4 + $0x350] sm:$0xff]
    %v1210 = vld [vmem:[#allocation4 + $0x358] sm:$0xff]
    %v1211 = vld [vmem:[#allocation4 + $0x360] sm:$0xff]
    %v1212 = vld [vmem:[#allocation4 + $0x368] sm:$0xff]
    %v1213 = vld [vmem:[#allocation4 + $0x370] sm:$0xff]
    %v1214 = vld [vmem:[#allocation4 + $0x378] sm:$0xff]
    %v1215 = vld [vmem:[#allocation4 + $0x380] sm:$0xff]
    %v1216 = vld [vmem:[#allocation4 + $0x388] sm:$0xff]
    %v1217 = vld [vmem:[#allocation4 + $0x390] sm:$0xff]
    %v1218 = vld [vmem:[#allocation4 + $0x398] sm:$0xff]
    %v1219 = vld [vmem:[#allocation4 + $0x3a0] sm:$0xff]
    %v1220 = vld [vmem:[#allocation4 + $0x3a8] sm:$0xff]
    %v1221 = vld [vmem:[#allocation4 + $0x3b0] sm:$0xff]
    %v1222 = vld [vmem:[#allocation4 + $0x3b8] sm:$0xff]
    %v1223 = vld [vmem:[#allocation4 + $0x3c0] sm:$0xff]
    %v1224 = vld [vmem:[#allocation4 + $0x3c8] sm:$0xff]
    %v1225 = vld [vmem:[#allocation4 + $0x3d0] sm:$0xff]
    %v1226 = vld [vmem:[#allocation4 + $0x3d8] sm:$0xff]
    %v1227 = vld [vmem:[#allocation4 + $0x3e0] sm:$0xff]
    %v1228 = vld [vmem:[#allocation4 + $0x3e8] sm:$0xff]
    %v1229 = vld [vmem:[#allocation4 + $0x3f0] sm:$0xff]
    %v1230 = vld [vmem:[#allocation4 + $0x3f8] sm:$0xff]
    %v1231 = vld [vmem:[%s4] sm:$0xf]
    %v1233 = vperm.slane %v1231, 0
    %v1234 = vperm.slane %v1231, 1
    %v1235 = vperm.slane %v1231, 2
    %v1236 = vperm.slane %v1231, 3
    %v1369 = vunpack.c.l.b16 %v1103
    %v1370 = vunpack.c.h.b16 %v1103
    %v1371 = vunpack.c.l.b16 %v1104
    %v1372 = vunpack.c.h.b16 %v1104
    %v1373 = vunpack.c.l.b16 %v1105
    %v1374 = vunpack.c.h.b16 %v1105
    %v1375 = vunpack.c.l.b16 %v1106
    %v1376 = vunpack.c.h.b16 %v1106
    %v1377 = vunpack.c.l.b16 %v1107
    %v1378 = vunpack.c.h.b16 %v1107
    %v1379 = vunpack.c.l.b16 %v1108
    %v1380 = vunpack.c.h.b16 %v1108
    %v1381 = vunpack.c.l.b16 %v1109
    %v1382 = vunpack.c.h.b16 %v1109
    %v1383 = vunpack.c.l.b16 %v1110
    %v1384 = vunpack.c.h.b16 %v1110
    %v1385 = vunpack.c.l.b16 %v1111
    %v1386 = vunpack.c.h.b16 %v1111
    %v1387 = vunpack.c.l.b16 %v1112
    %v1388 = vunpack.c.h.b16 %v1112
    %v1389 = vunpack.c.l.b16 %v1113
    %v1390 = vunpack.c.h.b16 %v1113
    %v1391 = vunpack.c.l.b16 %v1114
    %v1392 = vunpack.c.h.b16 %v1114
    %v1393 = vunpack.c.l.b16 %v1115
    %v1394 = vunpack.c.h.b16 %v1115
    %v1395 = vunpack.c.l.b16 %v1116
    %v1396 = vunpack.c.h.b16 %v1116
    %v1397 = vunpack.c.l.b16 %v1117
    %v1398 = vunpack.c.h.b16 %v1117
    %v1399 = vunpack.c.l.b16 %v1118
    %v1400 = vunpack.c.h.b16 %v1118
    %v1401 = vunpack.c.l.b16 %v1119
    %v1402 = vunpack.c.h.b16 %v1119
    %v1403 = vunpack.c.l.b16 %v1120
    %v1404 = vunpack.c.h.b16 %v1120
    %v1405 = vunpack.c.l.b16 %v1121
    %v1406 = vunpack.c.h.b16 %v1121
    %v1407 = vunpack.c.l.b16 %v1122
    %v1408 = vunpack.c.h.b16 %v1122
    %v1409 = vunpack.c.l.b16 %v1123
    %v1410 = vunpack.c.h.b16 %v1123
    %v1411 = vunpack.c.l.b16 %v1124
    %v1412 = vunpack.c.h.b16 %v1124
    %v1413 = vunpack.c.l.b16 %v1125
    %v1414 = vunpack.c.h.b16 %v1125
    %v1415 = vunpack.c.l.b16 %v1126
    %v1416 = vunpack.c.h.b16 %v1126
    %v1417 = vunpack.c.l.b16 %v1127
    %v1418 = vunpack.c.h.b16 %v1127
    %v1419 = vunpack.c.l.b16 %v1128
    %v1420 = vunpack.c.h.b16 %v1128
    %v1421 = vunpack.c.l.b16 %v1129
    %v1422 = vunpack.c.h.b16 %v1129
    %v1423 = vunpack.c.l.b16 %v1130
    %v1424 = vunpack.c.h.b16 %v1130
    %v1425 = vunpack.c.l.b16 %v1131
    %v1426 = vunpack.c.h.b16 %v1131
    %v1427 = vunpack.c.l.b16 %v1132
    %v1428 = vunpack.c.h.b16 %v1132
    %v1429 = vunpack.c.l.b16 %v1133
    %v1430 = vunpack.c.h.b16 %v1133
    %v1431 = vunpack.c.l.b16 %v1134
    %v1432 = vunpack.c.h.b16 %v1134
    %v1433 = vunpack.c.l.b16 %v1135
    %v1434 = vunpack.c.h.b16 %v1135
    %v1435 = vunpack.c.l.b16 %v1136
    %v1436 = vunpack.c.h.b16 %v1136
    %v1437 = vunpack.c.l.b16 %v1137
    %v1438 = vunpack.c.h.b16 %v1137
    %v1439 = vunpack.c.l.b16 %v1138
    %v1440 = vunpack.c.h.b16 %v1138
    %v1441 = vunpack.c.l.b16 %v1139
    %v1442 = vunpack.c.h.b16 %v1139
    %v1443 = vunpack.c.l.b16 %v1140
    %v1444 = vunpack.c.h.b16 %v1140
    %v1445 = vunpack.c.l.b16 %v1141
    %v1446 = vunpack.c.h.b16 %v1141
    %v1447 = vunpack.c.l.b16 %v1142
    %v1448 = vunpack.c.h.b16 %v1142
    %v1449 = vunpack.c.l.b16 %v1143
    %v1450 = vunpack.c.h.b16 %v1143
    %v1451 = vunpack.c.l.b16 %v1144
    %v1452 = vunpack.c.h.b16 %v1144
    %v1453 = vunpack.c.l.b16 %v1145
    %v1454 = vunpack.c.h.b16 %v1145
    %v1455 = vunpack.c.l.b16 %v1146
    %v1456 = vunpack.c.h.b16 %v1146
    %v1457 = vunpack.c.l.b16 %v1147
    %v1458 = vunpack.c.h.b16 %v1147
    %v1459 = vunpack.c.l.b16 %v1148
    %v1460 = vunpack.c.h.b16 %v1148
    %v1461 = vunpack.c.l.b16 %v1149
    %v1462 = vunpack.c.h.b16 %v1149
    %v1463 = vunpack.c.l.b16 %v1150
    %v1464 = vunpack.c.h.b16 %v1150
    %v1465 = vunpack.c.l.b16 %v1151
    %v1466 = vunpack.c.h.b16 %v1151
    %v1467 = vunpack.c.l.b16 %v1152
    %v1468 = vunpack.c.h.b16 %v1152
    %v1469 = vunpack.c.l.b16 %v1153
    %v1470 = vunpack.c.h.b16 %v1153
    %v1471 = vunpack.c.l.b16 %v1154
    %v1472 = vunpack.c.h.b16 %v1154
    %v1473 = vunpack.c.l.b16 %v1155
    %v1474 = vunpack.c.h.b16 %v1155
    %v1475 = vunpack.c.l.b16 %v1156
    %v1476 = vunpack.c.h.b16 %v1156
    %v1477 = vunpack.c.l.b16 %v1157
    %v1478 = vunpack.c.h.b16 %v1157
    %v1479 = vunpack.c.l.b16 %v1158
    %v1480 = vunpack.c.h.b16 %v1158
    %v1481 = vunpack.c.l.b16 %v1159
    %v1482 = vunpack.c.h.b16 %v1159
    %v1483 = vunpack.c.l.b16 %v1160
    %v1484 = vunpack.c.h.b16 %v1160
    %v1485 = vunpack.c.l.b16 %v1161
    %v1486 = vunpack.c.h.b16 %v1161
    %v1487 = vunpack.c.l.b16 %v1162
    %v1488 = vunpack.c.h.b16 %v1162
    %v1489 = vunpack.c.l.b16 %v1163
    %v1490 = vunpack.c.h.b16 %v1163
    %v1491 = vunpack.c.l.b16 %v1164
    %v1492 = vunpack.c.h.b16 %v1164
    %v1493 = vunpack.c.l.b16 %v1165
    %v1494 = vunpack.c.h.b16 %v1165
    %v1495 = vunpack.c.l.b16 %v1166
    %v1496 = vunpack.c.h.b16 %v1166
    %v1497 = vunpack.c.l.b16 %v1167
    %v1498 = vunpack.c.h.b16 %v1167
    %v1499 = vunpack.c.l.b16 %v1168
    %v1500 = vunpack.c.h.b16 %v1168
    %v1501 = vunpack.c.l.b16 %v1169
    %v1502 = vunpack.c.h.b16 %v1169
    %v1503 = vunpack.c.l.b16 %v1170
    %v1504 = vunpack.c.h.b16 %v1170
    %v1505 = vunpack.c.l.b16 %v1171
    %v1506 = vunpack.c.h.b16 %v1171
    %v1507 = vunpack.c.l.b16 %v1172
    %v1508 = vunpack.c.h.b16 %v1172
    %v1509 = vunpack.c.l.b16 %v1173
    %v1510 = vunpack.c.h.b16 %v1173
    %v1511 = vunpack.c.l.b16 %v1174
    %v1512 = vunpack.c.h.b16 %v1174
    %v1513 = vunpack.c.l.b16 %v1175
    %v1514 = vunpack.c.h.b16 %v1175
    %v1515 = vunpack.c.l.b16 %v1176
    %v1516 = vunpack.c.h.b16 %v1176
    %v1517 = vunpack.c.l.b16 %v1177
    %v1518 = vunpack.c.h.b16 %v1177
    %v1519 = vunpack.c.l.b16 %v1178
    %v1520 = vunpack.c.h.b16 %v1178
    %v1521 = vunpack.c.l.b16 %v1179
    %v1522 = vunpack.c.h.b16 %v1179
    %v1523 = vunpack.c.l.b16 %v1180
    %v1524 = vunpack.c.h.b16 %v1180
    %v1525 = vunpack.c.l.b16 %v1181
    %v1526 = vunpack.c.h.b16 %v1181
    %v1527 = vunpack.c.l.b16 %v1182
    %v1528 = vunpack.c.h.b16 %v1182
    %v1529 = vunpack.c.l.b16 %v1183
    %v1530 = vunpack.c.h.b16 %v1183
    %v1531 = vunpack.c.l.b16 %v1184
    %v1532 = vunpack.c.h.b16 %v1184
    %v1533 = vunpack.c.l.b16 %v1185
    %v1534 = vunpack.c.h.b16 %v1185
    %v1535 = vunpack.c.l.b16 %v1186
    %v1536 = vunpack.c.h.b16 %v1186
    %v1537 = vunpack.c.l.b16 %v1187
    %v1538 = vunpack.c.h.b16 %v1187
    %v1539 = vunpack.c.l.b16 %v1188
    %v1540 = vunpack.c.h.b16 %v1188
    %v1541 = vunpack.c.l.b16 %v1189
    %v1542 = vunpack.c.h.b16 %v1189
    %v1543 = vunpack.c.l.b16 %v1190
    %v1544 = vunpack.c.h.b16 %v1190
    %v1545 = vunpack.c.l.b16 %v1191
    %v1546 = vunpack.c.h.b16 %v1191
    %v1547 = vunpack.c.l.b16 %v1192
    %v1548 = vunpack.c.h.b16 %v1192
    %v1549 = vunpack.c.l.b16 %v1193
    %v1550 = vunpack.c.h.b16 %v1193
    %v1551 = vunpack.c.l.b16 %v1194
    %v1552 = vunpack.c.h.b16 %v1194
    %v1553 = vunpack.c.l.b16 %v1195
    %v1554 = vunpack.c.h.b16 %v1195
    %v1555 = vunpack.c.l.b16 %v1196
    %v1556 = vunpack.c.h.b16 %v1196
    %v1557 = vunpack.c.l.b16 %v1197
    %v1558 = vunpack.c.h.b16 %v1197
    %v1559 = vunpack.c.l.b16 %v1198
    %v1560 = vunpack.c.h.b16 %v1198
    %v1561 = vunpack.c.l.b16 %v1199
    %v1562 = vunpack.c.h.b16 %v1199
    %v1563 = vunpack.c.l.b16 %v1200
    %v1564 = vunpack.c.h.b16 %v1200
    %v1565 = vunpack.c.l.b16 %v1201
    %v1566 = vunpack.c.h.b16 %v1201
    %v1567 = vunpack.c.l.b16 %v1202
    %v1568 = vunpack.c.h.b16 %v1202
    %v1569 = vunpack.c.l.b16 %v1203
    %v1570 = vunpack.c.h.b16 %v1203
    %v1571 = vunpack.c.l.b16 %v1204
    %v1572 = vunpack.c.h.b16 %v1204
    %v1573 = vunpack.c.l.b16 %v1205
    %v1574 = vunpack.c.h.b16 %v1205
    %v1575 = vunpack.c.l.b16 %v1206
    %v1576 = vunpack.c.h.b16 %v1206
    %v1577 = vunpack.c.l.b16 %v1207
    %v1578 = vunpack.c.h.b16 %v1207
    %v1579 = vunpack.c.l.b16 %v1208
    %v1580 = vunpack.c.h.b16 %v1208
    %v1581 = vunpack.c.l.b16 %v1209
    %v1582 = vunpack.c.h.b16 %v1209
    %v1583 = vunpack.c.l.b16 %v1210
    %v1584 = vunpack.c.h.b16 %v1210
    %v1585 = vunpack.c.l.b16 %v1211
    %v1586 = vunpack.c.h.b16 %v1211
    %v1587 = vunpack.c.l.b16 %v1212
    %v1588 = vunpack.c.h.b16 %v1212
    %v1589 = vunpack.c.l.b16 %v1213
    %v1590 = vunpack.c.h.b16 %v1213
    %v1591 = vunpack.c.l.b16 %v1214
    %v1592 = vunpack.c.h.b16 %v1214
    %v1593 = vunpack.c.l.b16 %v1215
    %v1594 = vunpack.c.h.b16 %v1215
    %v1595 = vunpack.c.l.b16 %v1216
    %v1596 = vunpack.c.h.b16 %v1216
    %v1597 = vunpack.c.l.b16 %v1217
    %v1598 = vunpack.c.h.b16 %v1217
    %v1599 = vunpack.c.l.b16 %v1218
    %v1600 = vunpack.c.h.b16 %v1218
    %v1601 = vunpack.c.l.b16 %v1219
    %v1602 = vunpack.c.h.b16 %v1219
    %v1603 = vunpack.c.l.b16 %v1220
    %v1604 = vunpack.c.h.b16 %v1220
    %v1605 = vunpack.c.l.b16 %v1221
    %v1606 = vunpack.c.h.b16 %v1221
    %v1607 = vunpack.c.l.b16 %v1222
    %v1608 = vunpack.c.h.b16 %v1222
    %v1609 = vunpack.c.l.b16 %v1223
    %v1610 = vunpack.c.h.b16 %v1223
    %v1611 = vunpack.c.l.b16 %v1224
    %v1612 = vunpack.c.h.b16 %v1224
    %v1613 = vunpack.c.l.b16 %v1225
    %v1614 = vunpack.c.h.b16 %v1225
    %v1615 = vunpack.c.l.b16 %v1226
    %v1616 = vunpack.c.h.b16 %v1226
    %v1617 = vunpack.c.l.b16 %v1227
    %v1618 = vunpack.c.h.b16 %v1227
    %v1619 = vunpack.c.l.b16 %v1228
    %v1620 = vunpack.c.h.b16 %v1228
    %v1621 = vunpack.c.l.b16 %v1229
    %v1622 = vunpack.c.h.b16 %v1229
    %v1623 = vunpack.c.l.b16 %v1230
    %v1624 = vunpack.c.h.b16 %v1230
    %v1625 = vpack.c.b16 %v1373, %v1369
    %v1626 = vpack.c.b16 %v1374, %v1370
    %v1627 = vpack.c.b16 %v1375, %v1371
    %v1628 = vpack.c.b16 %v1376, %v1372
    %v1629 = vpack.c.b16 %v1381, %v1377
    %v1630 = vpack.c.b16 %v1382, %v1378
    %v1631 = vpack.c.b16 %v1383, %v1379
    %v1632 = vpack.c.b16 %v1384, %v1380
    %v1633 = vpack.c.b16 %v1389, %v1385
    %v1634 = vpack.c.b16 %v1390, %v1386
    %v1635 = vpack.c.b16 %v1391, %v1387
    %v1636 = vpack.c.b16 %v1392, %v1388
    %v1637 = vpack.c.b16 %v1397, %v1393
    %v1638 = vpack.c.b16 %v1398, %v1394
    %v1639 = vpack.c.b16 %v1399, %v1395
    %v1640 = vpack.c.b16 %v1400, %v1396
    %v1641 = vpack.c.b16 %v1405, %v1401
    %v1642 = vpack.c.b16 %v1406, %v1402
    %v1643 = vpack.c.b16 %v1407, %v1403
    %v1644 = vpack.c.b16 %v1408, %v1404
    %v1645 = vpack.c.b16 %v1413, %v1409
    %v1646 = vpack.c.b16 %v1414, %v1410
    %v1647 = vpack.c.b16 %v1415, %v1411
    %v1648 = vpack.c.b16 %v1416, %v1412
    %v1649 = vpack.c.b16 %v1421, %v1417
    %v1650 = vpack.c.b16 %v1422, %v1418
    %v1651 = vpack.c.b16 %v1423, %v1419
    %v1652 = vpack.c.b16 %v1424, %v1420
    %v1653 = vpack.c.b16 %v1429, %v1425
    %v1654 = vpack.c.b16 %v1430, %v1426
    %v1655 = vpack.c.b16 %v1431, %v1427
    %v1656 = vpack.c.b16 %v1432, %v1428
    %v1657 = vpack.c.b16 %v1437, %v1433
    %v1658 = vpack.c.b16 %v1438, %v1434
    %v1659 = vpack.c.b16 %v1439, %v1435
    %v1660 = vpack.c.b16 %v1440, %v1436
    %v1661 = vpack.c.b16 %v1445, %v1441
    %v1662 = vpack.c.b16 %v1446, %v1442
    %v1663 = vpack.c.b16 %v1447, %v1443
    %v1664 = vpack.c.b16 %v1448, %v1444
    %v1665 = vpack.c.b16 %v1453, %v1449
    %v1666 = vpack.c.b16 %v1454, %v1450
    %v1667 = vpack.c.b16 %v1455, %v1451
    %v1668 = vpack.c.b16 %v1456, %v1452
    %v1669 = vpack.c.b16 %v1461, %v1457
    %v1670 = vpack.c.b16 %v1462, %v1458
    %v1671 = vpack.c.b16 %v1463, %v1459
    %v1672 = vpack.c.b16 %v1464, %v1460
    %v1673 = vpack.c.b16 %v1469, %v1465
    %v1674 = vpack.c.b16 %v1470, %v1466
    %v1675 = vpack.c.b16 %v1471, %v1467
    %v1676 = vpack.c.b16 %v1472, %v1468
    %v1677 = vpack.c.b16 %v1477, %v1473
    %v1678 = vpack.c.b16 %v1478, %v1474
    %v1679 = vpack.c.b16 %v1479, %v1475
    %v1680 = vpack.c.b16 %v1480, %v1476
    %v1681 = vpack.c.b16 %v1485, %v1481
    %v1682 = vpack.c.b16 %v1486, %v1482
    %v1683 = vpack.c.b16 %v1487, %v1483
    %v1684 = vpack.c.b16 %v1488, %v1484
    %v1685 = vpack.c.b16 %v1493, %v1489
    %v1686 = vpack.c.b16 %v1494, %v1490
    %v1687 = vpack.c.b16 %v1495, %v1491
    %v1688 = vpack.c.b16 %v1496, %v1492
    %v1689 = vpack.c.b16 %v1501, %v1497
    %v1690 = vpack.c.b16 %v1502, %v1498
    %v1691 = vpack.c.b16 %v1503, %v1499
    %v1692 = vpack.c.b16 %v1504, %v1500
    %v1693 = vpack.c.b16 %v1509, %v1505
    %v1694 = vpack.c.b16 %v1510, %v1506
    %v1695 = vpack.c.b16 %v1511, %v1507
    %v1696 = vpack.c.b16 %v1512, %v1508
    %v1697 = vpack.c.b16 %v1517, %v1513
    %v1698 = vpack.c.b16 %v1518, %v1514
    %v1699 = vpack.c.b16 %v1519, %v1515
    %v1700 = vpack.c.b16 %v1520, %v1516
    %v1701 = vpack.c.b16 %v1525, %v1521
    %v1702 = vpack.c.b16 %v1526, %v1522
    %v1703 = vpack.c.b16 %v1527, %v1523
    %v1704 = vpack.c.b16 %v1528, %v1524
    %v1705 = vpack.c.b16 %v1533, %v1529
    %v1706 = vpack.c.b16 %v1534, %v1530
    %v1707 = vpack.c.b16 %v1535, %v1531
    %v1708 = vpack.c.b16 %v1536, %v1532
    %v1709 = vpack.c.b16 %v1541, %v1537
    %v1710 = vpack.c.b16 %v1542, %v1538
    %v1711 = vpack.c.b16 %v1543, %v1539
    %v1712 = vpack.c.b16 %v1544, %v1540
    %v1713 = vpack.c.b16 %v1549, %v1545
    %v1714 = vpack.c.b16 %v1550, %v1546
    %v1715 = vpack.c.b16 %v1551, %v1547
    %v1716 = vpack.c.b16 %v1552, %v1548
    %v1717 = vpack.c.b16 %v1557, %v1553
    %v1718 = vpack.c.b16 %v1558, %v1554
    %v1719 = vpack.c.b16 %v1559, %v1555
    %v1720 = vpack.c.b16 %v1560, %v1556
    %v1721 = vpack.c.b16 %v1565, %v1561
    %v1722 = vpack.c.b16 %v1566, %v1562
    %v1723 = vpack.c.b16 %v1567, %v1563
    %v1724 = vpack.c.b16 %v1568, %v1564
    %v1725 = vpack.c.b16 %v1573, %v1569
    %v1726 = vpack.c.b16 %v1574, %v1570
    %v1727 = vpack.c.b16 %v1575, %v1571
    %v1728 = vpack.c.b16 %v1576, %v1572
    %v1729 = vpack.c.b16 %v1581, %v1577
    %v1730 = vpack.c.b16 %v1582, %v1578
    %v1731 = vpack.c.b16 %v1583, %v1579
    %v1732 = vpack.c.b16 %v1584, %v1580
    %v1733 = vpack.c.b16 %v1589, %v1585
    %v1734 = vpack.c.b16 %v1590, %v1586
    %v1735 = vpack.c.b16 %v1591, %v1587
    %v1736 = vpack.c.b16 %v1592, %v1588
    %v1737 = vpack.c.b16 %v1597, %v1593
    %v1738 = vpack.c.b16 %v1598, %v1594
    %v1739 = vpack.c.b16 %v1599, %v1595
    %v1740 = vpack.c.b16 %v1600, %v1596
    %v1741 = vpack.c.b16 %v1605, %v1601
    %v1742 = vpack.c.b16 %v1606, %v1602
    %v1743 = vpack.c.b16 %v1607, %v1603
    %v1744 = vpack.c.b16 %v1608, %v1604
    %v1745 = vpack.c.b16 %v1613, %v1609
    %v1746 = vpack.c.b16 %v1614, %v1610
    %v1747 = vpack.c.b16 %v1615, %v1611
    %v1748 = vpack.c.b16 %v1616, %v1612
    %v1749 = vpack.c.b16 %v1621, %v1617
    %v1750 = vpack.c.b16 %v1622, %v1618
    %v1751 = vpack.c.b16 %v1623, %v1619
    %v1752 = vpack.c.b16 %v1624, %v1620
    %1881 = vmatpush.bf16.msra.mxu0 %v1653
    %1882 = vmatpush.bf16.msra.mxu0 %v1649
    %1883 = vmatpush.bf16.msra.mxu0 %v1645
    %1884 = vmatpush.bf16.msra.mxu0 %v1641
    %1885 = vmatpush.bf16.msra.mxu0 %v1637
    %1886 = vmatpush.bf16.msra.mxu0 %v1633
    %1887 = vmatpush.bf16.msra.mxu0 %v1629
    %1888 = vmatpush.bf16.msra.mxu0 %v1625
    %1889 = vmatmul.bf16.gmra.mxu0 %v1099
    %v1890 = vpop.f32.mrf.mxu0
    %v1891 = vadd.f32 %v1233, %v1890
    %v1892 = vpop.f32.mrf.mxu0
    %1893 = vdwg.mxu0
    %1894 = vmatpush.bf16.msra.mxu0 %v1685
    %1895 = vmatpush.bf16.msra.mxu0 %v1681
    %1896 = vmatpush.bf16.msra.mxu0 %v1677
    %1897 = vmatpush.bf16.msra.mxu0 %v1673
    %1898 = vmatpush.bf16.msra.mxu0 %v1669
    %1899 = vmatpush.bf16.msra.mxu0 %v1665
    %1900 = vmatpush.bf16.msra.mxu0 %v1661
    %1901 = vmatpush.bf16.msra.mxu0 %v1657
    %1902 = vmatmul.bf16.gmra.mxu0 %v1100
    %v1903 = vpop.f32.mrf.mxu0
    %v1904 = vadd.f32 %v1891, %v1903
    %v1905 = vpop.f32.mrf.mxu0
    %1906 = vdwg.mxu0
    %1907 = vmatpush.bf16.msra.mxu0 %v1717
    %1908 = vmatpush.bf16.msra.mxu0 %v1713
    %1909 = vmatpush.bf16.msra.mxu0 %v1709
    %1910 = vmatpush.bf16.msra.mxu0 %v1705
    %1911 = vmatpush.bf16.msra.mxu0 %v1701
    %1912 = vmatpush.bf16.msra.mxu0 %v1697
    %1913 = vmatpush.bf16.msra.mxu0 %v1693
    %1914 = vmatpush.bf16.msra.mxu0 %v1689
    %1915 = vmatmul.bf16.gmra.mxu0 %v1101
    %v1916 = vpop.f32.mrf.mxu0
    %v1917 = vadd.f32 %v1904, %v1916
    %v1918 = vpop.f32.mrf.mxu0
    %1919 = vdwg.mxu0
    %1920 = vmatpush.bf16.msra.mxu0 %v1749
    %1921 = vmatpush.bf16.msra.mxu0 %v1745
    %1922 = vmatpush.bf16.msra.mxu0 %v1741
    %1923 = vmatpush.bf16.msra.mxu0 %v1737
    %1924 = vmatpush.bf16.msra.mxu0 %v1733
    %1925 = vmatpush.bf16.msra.mxu0 %v1729
    %1926 = vmatpush.bf16.msra.mxu0 %v1725
    %1927 = vmatpush.bf16.msra.mxu0 %v1721
    %1928 = vmatmul.bf16.gmra.mxu0 %v1102
    %v1929 = vpop.f32.mrf.mxu0
    %v1930 = vadd.f32 %v1917, %v1929
    %v1931 = vpop.f32.mrf.mxu0
    %1932 = vdwg.mxu0
    %1933 = vmatpush.bf16.msra.mxu0 %v1654
    %1934 = vmatpush.bf16.msra.mxu0 %v1650
    %1935 = vmatpush.bf16.msra.mxu0 %v1646
    %1936 = vmatpush.bf16.msra.mxu0 %v1642
    %1937 = vmatpush.bf16.msra.mxu0 %v1638
    %1938 = vmatpush.bf16.msra.mxu0 %v1634
    %1939 = vmatpush.bf16.msra.mxu0 %v1630
    %1940 = vmatpush.bf16.msra.mxu0 %v1626
    %1941 = vmatmul.bf16.gmra.mxu0 %v1099
    %v1942 = vpop.f32.mrf.mxu0
    %v1943 = vadd.f32 %v1234, %v1942
    %v1944 = vpop.f32.mrf.mxu0
    %1945 = vdwg.mxu0
    %1946 = vmatpush.bf16.msra.mxu0 %v1686
    %1947 = vmatpush.bf16.msra.mxu0 %v1682
    %1948 = vmatpush.bf16.msra.mxu0 %v1678
    %1949 = vmatpush.bf16.msra.mxu0 %v1674
    %1950 = vmatpush.bf16.msra.mxu0 %v1670
    %1951 = vmatpush.bf16.msra.mxu0 %v1666
    %1952 = vmatpush.bf16.msra.mxu0 %v1662
    %1953 = vmatpush.bf16.msra.mxu0 %v1658
    %1954 = vmatmul.bf16.gmra.mxu0 %v1100
    %v1955 = vpop.f32.mrf.mxu0
    %v1956 = vadd.f32 %v1943, %v1955
    %v1957 = vpop.f32.mrf.mxu0
    %1958 = vdwg.mxu0
    %1959 = vmatpush.bf16.msra.mxu0 %v1718
    %1960 = vmatpush.bf16.msra.mxu0 %v1714
    %1961 = vmatpush.bf16.msra.mxu0 %v1710
    %1962 = vmatpush.bf16.msra.mxu0 %v1706
    %1963 = vmatpush.bf16.msra.mxu0 %v1702
    %1964 = vmatpush.bf16.msra.mxu0 %v1698
    %1965 = vmatpush.bf16.msra.mxu0 %v1694
    %1966 = vmatpush.bf16.msra.mxu0 %v1690
    %1967 = vmatmul.bf16.gmra.mxu0 %v1101
    %v1968 = vpop.f32.mrf.mxu0
    %v1969 = vadd.f32 %v1956, %v1968
    %v1970 = vpop.f32.mrf.mxu0
    %1971 = vdwg.mxu0
    %1972 = vmatpush.bf16.msra.mxu0 %v1750
    %1973 = vmatpush.bf16.msra.mxu0 %v1746
    %1974 = vmatpush.bf16.msra.mxu0 %v1742
    %1975 = vmatpush.bf16.msra.mxu0 %v1738
    %1976 = vmatpush.bf16.msra.mxu0 %v1734
    %1977 = vmatpush.bf16.msra.mxu0 %v1730
    %1978 = vmatpush.bf16.msra.mxu0 %v1726
    %1979 = vmatpush.bf16.msra.mxu0 %v1722
    %1980 = vmatmul.bf16.gmra.mxu0 %v1102
    %v1981 = vpop.f32.mrf.mxu0
    %v1982 = vadd.f32 %v1969, %v1981
    %v1983 = vpop.f32.mrf.mxu0
    %1984 = vdwg.mxu0
    %1985 = vmatpush.bf16.msra.mxu0 %v1655
    %1986 = vmatpush.bf16.msra.mxu0 %v1651
    %1987 = vmatpush.bf16.msra.mxu0 %v1647
    %1988 = vmatpush.bf16.msra.mxu0 %v1643
    %1989 = vmatpush.bf16.msra.mxu0 %v1639
    %1990 = vmatpush.bf16.msra.mxu0 %v1635
    %1991 = vmatpush.bf16.msra.mxu0 %v1631
    %1992 = vmatpush.bf16.msra.mxu0 %v1627
    %1993 = vmatmul.bf16.gmra.mxu0 %v1099
    %v1994 = vpop.f32.mrf.mxu0
    %v1995 = vadd.f32 %v1235, %v1994
    %v1996 = vpop.f32.mrf.mxu0
    %1997 = vdwg.mxu0
    %1998 = vmatpush.bf16.msra.mxu0 %v1687
    %1999 = vmatpush.bf16.msra.mxu0 %v1683
    %2000 = vmatpush.bf16.msra.mxu0 %v1679
    %2001 = vmatpush.bf16.msra.mxu0 %v1675
    %2002 = vmatpush.bf16.msra.mxu0 %v1671
    %2003 = vmatpush.bf16.msra.mxu0 %v1667
    %2004 = vmatpush.bf16.msra.mxu0 %v1663
    %2005 = vmatpush.bf16.msra.mxu0 %v1659
    %2006 = vmatmul.bf16.gmra.mxu0 %v1100
    %v2007 = vpop.f32.mrf.mxu0
    %v2008 = vadd.f32 %v1995, %v2007
    %v2009 = vpop.f32.mrf.mxu0
    %2010 = vdwg.mxu0
    %2011 = vmatpush.bf16.msra.mxu0 %v1719
    %2012 = vmatpush.bf16.msra.mxu0 %v1715
    %2013 = vmatpush.bf16.msra.mxu0 %v1711
    %2014 = vmatpush.bf16.msra.mxu0 %v1707
    %2015 = vmatpush.bf16.msra.mxu0 %v1703
    %2016 = vmatpush.bf16.msra.mxu0 %v1699
    %2017 = vmatpush.bf16.msra.mxu0 %v1695
    %2018 = vmatpush.bf16.msra.mxu0 %v1691
    %2019 = vmatmul.bf16.gmra.mxu0 %v1101
    %v2020 = vpop.f32.mrf.mxu0
    %v2021 = vadd.f32 %v2008, %v2020
    %v2022 = vpop.f32.mrf.mxu0
    %2023 = vdwg.mxu0
    %2024 = vmatpush.bf16.msra.mxu0 %v1751
    %2025 = vmatpush.bf16.msra.mxu0 %v1747
    %2026 = vmatpush.bf16.msra.mxu0 %v1743
    %2027 = vmatpush.bf16.msra.mxu0 %v1739
    %2028 = vmatpush.bf16.msra.mxu0 %v1735
    %2029 = vmatpush.bf16.msra.mxu0 %v1731
    %2030 = vmatpush.bf16.msra.mxu0 %v1727
    %2031 = vmatpush.bf16.msra.mxu0 %v1723
    %2032 = vmatmul.bf16.gmra.mxu0 %v1102
    %v2033 = vpop.f32.mrf.mxu0
    %v2034 = vadd.f32 %v2021, %v2033
    %v2035 = vpop.f32.mrf.mxu0
    %2036 = vdwg.mxu0
    %2037 = vmatpush.bf16.msra.mxu0 %v1656
    %2038 = vmatpush.bf16.msra.mxu0 %v1652
    %2039 = vmatpush.bf16.msra.mxu0 %v1648
    %2040 = vmatpush.bf16.msra.mxu0 %v1644
    %2041 = vmatpush.bf16.msra.mxu0 %v1640
    %2042 = vmatpush.bf16.msra.mxu0 %v1636
    %2043 = vmatpush.bf16.msra.mxu0 %v1632
    %2044 = vmatpush.bf16.msra.mxu0 %v1628
    %2045 = vmatmul.bf16.gmra.mxu0 %v1099
    %v2046 = vpop.f32.mrf.mxu0
    %v2047 = vadd.f32 %v1236, %v2046
    %v2048 = vpop.f32.mrf.mxu0
    %2049 = vdwg.mxu0
    %2050 = vmatpush.bf16.msra.mxu0 %v1688
    %2051 = vmatpush.bf16.msra.mxu0 %v1684
    %2052 = vmatpush.bf16.msra.mxu0 %v1680
    %2053 = vmatpush.bf16.msra.mxu0 %v1676
    %2054 = vmatpush.bf16.msra.mxu0 %v1672
    %2055 = vmatpush.bf16.msra.mxu0 %v1668
    %2056 = vmatpush.bf16.msra.mxu0 %v1664
    %2057 = vmatpush.bf16.msra.mxu0 %v1660
    %2058 = vmatmul.bf16.gmra.mxu0 %v1100
    %v2059 = vpop.f32.mrf.mxu0
    %v2060 = vadd.f32 %v2047, %v2059
    %v2061 = vpop.f32.mrf.mxu0
    %2062 = vdwg.mxu0
    %2063 = vmatpush.bf16.msra.mxu0 %v1720
    %2064 = vmatpush.bf16.msra.mxu0 %v1716
    %2065 = vmatpush.bf16.msra.mxu0 %v1712
    %2066 = vmatpush.bf16.msra.mxu0 %v1708
    %2067 = vmatpush.bf16.msra.mxu0 %v1704
    %2068 = vmatpush.bf16.msra.mxu0 %v1700
    %2069 = vmatpush.bf16.msra.mxu0 %v1696
    %2070 = vmatpush.bf16.msra.mxu0 %v1692
    %2071 = vmatmul.bf16.gmra.mxu0 %v1101
    %v2072 = vpop.f32.mrf.mxu0
    %v2073 = vadd.f32 %v2060, %v2072
    %v2074 = vpop.f32.mrf.mxu0
    %2075 = vdwg.mxu0
    %2076 = vmatpush.bf16.msra.mxu0 %v1752
    %2077 = vmatpush.bf16.msra.mxu0 %v1748
    %2078 = vmatpush.bf16.msra.mxu0 %v1744
    %2079 = vmatpush.bf16.msra.mxu0 %v1740
    %2080 = vmatpush.bf16.msra.mxu0 %v1736
    %2081 = vmatpush.bf16.msra.mxu0 %v1732
    %2082 = vmatpush.bf16.msra.mxu0 %v1728
    %2083 = vmatpush.bf16.msra.mxu0 %v1724
    %2084 = vmatmul.bf16.gmra.mxu0 %v1102
    %v2085 = vpop.f32.mrf.mxu0
    %v2086 = vadd.f32 %v2073, %v2085
    %v2087 = vpop.f32.mrf.mxu0
    %2088 = vdwg.mxu0
    %v2089 = vpack.c.bf16 %v1982, %v1930
    %v2090 = vpack.c.bf16 %v2086, %v2034
    %v2091 = vunpack.c.l.bf16 %v2089
    %v2092 = vunpack.c.h.bf16 %v2089
    %v2093 = vunpack.c.l.bf16 %v2090
    %v2094 = vunpack.c.h.bf16 %v2090
    %v2095 = vmax.f32 %v2091, 0.0
    %v2096 = vmax.f32 %v2092, 0.0
    %v2097 = vmax.f32 %v2093, 0.0
    %v2098 = vmax.f32 %v2094, 0.0
    %v2099 = vpack.c.bf16 %v2095, %v2095
    %v2100 = vpack.c.bf16 %v2096, %v2096
    %v2101 = vpack.c.bf16 %v2097, %v2097
    %v2102 = vpack.c.bf16 %v2098, %v2098
    %v2103 = vld [vmem:[#allocation6] sm:$0xff]
    %v2104 = vld [vmem:[#allocation6 + $0x8] sm:$0xff]
    %v2105 = vld [vmem:[#allocation6 + $0x10] sm:$0xff]
    %v2106 = vld [vmem:[#allocation6 + $0x18] sm:$0xff]
    %v2107 = vld [vmem:[#allocation6 + $0x20] sm:$0xff]
    %v2108 = vld [vmem:[#allocation6 + $0x28] sm:$0xff]
    %v2109 = vld [vmem:[#allocation6 + $0x30] sm:$0xff]
    %v2110 = vld [vmem:[#allocation6 + $0x38] sm:$0xff]
    %v2111 = vld [vmem:[#allocation6 + $0x40] sm:$0xff]
    %v2112 = vld [vmem:[#allocation6 + $0x48] sm:$0xff]
    %v2113 = vld [vmem:[#allocation6 + $0x50] sm:$0xff]
    %v2114 = vld [vmem:[#allocation6 + $0x58] sm:$0xff]
    %v2115 = vld [vmem:[#allocation6 + $0x60] sm:$0xff]
    %v2116 = vld [vmem:[#allocation6 + $0x68] sm:$0xff]
    %v2117 = vld [vmem:[#allocation6 + $0x70] sm:$0xff]
    %v2118 = vld [vmem:[#allocation6 + $0x78] sm:$0xff]
    %v2119 = vld [vmem:[#allocation6 + $0x80] sm:$0xff]
    %v2120 = vld [vmem:[#allocation6 + $0x88] sm:$0xff]
    %v2121 = vld [vmem:[#allocation6 + $0x90] sm:$0xff]
    %v2122 = vld [vmem:[#allocation6 + $0x98] sm:$0xff]
    %v2123 = vld [vmem:[#allocation6 + $0xa0] sm:$0xff]
    %v2124 = vld [vmem:[#allocation6 + $0xa8] sm:$0xff]
    %v2125 = vld [vmem:[#allocation6 + $0xb0] sm:$0xff]
    %v2126 = vld [vmem:[#allocation6 + $0xb8] sm:$0xff]
    %v2127 = vld [vmem:[#allocation6 + $0xc0] sm:$0xff]
    %v2128 = vld [vmem:[#allocation6 + $0xc8] sm:$0xff]
    %v2129 = vld [vmem:[#allocation6 + $0xd0] sm:$0xff]
    %v2130 = vld [vmem:[#allocation6 + $0xd8] sm:$0xff]
    %v2131 = vld [vmem:[#allocation6 + $0xe0] sm:$0xff]
    %v2132 = vld [vmem:[#allocation6 + $0xe8] sm:$0xff]
    %v2133 = vld [vmem:[#allocation6 + $0xf0] sm:$0xff]
    %v2134 = vld [vmem:[#allocation6 + $0xf8] sm:$0xff]
    %v2135 = vld [vmem:[#allocation6 + $0x100] sm:$0xff]
    %v2136 = vld [vmem:[#allocation6 + $0x108] sm:$0xff]
    %v2137 = vld [vmem:[#allocation6 + $0x110] sm:$0xff]
    %v2138 = vld [vmem:[#allocation6 + $0x118] sm:$0xff]
    %v2139 = vld [vmem:[#allocation6 + $0x120] sm:$0xff]
    %v2140 = vld [vmem:[#allocation6 + $0x128] sm:$0xff]
    %v2141 = vld [vmem:[#allocation6 + $0x130] sm:$0xff]
    %v2142 = vld [vmem:[#allocation6 + $0x138] sm:$0xff]
    %v2143 = vld [vmem:[#allocation6 + $0x140] sm:$0xff]
    %v2144 = vld [vmem:[#allocation6 + $0x148] sm:$0xff]
    %v2145 = vld [vmem:[#allocation6 + $0x150] sm:$0xff]
    %v2146 = vld [vmem:[#allocation6 + $0x158] sm:$0xff]
    %v2147 = vld [vmem:[#allocation6 + $0x160] sm:$0xff]
    %v2148 = vld [vmem:[#allocation6 + $0x168] sm:$0xff]
    %v2149 = vld [vmem:[#allocation6 + $0x170] sm:$0xff]
    %v2150 = vld [vmem:[#allocation6 + $0x178] sm:$0xff]
    %v2151 = vld [vmem:[#allocation6 + $0x180] sm:$0xff]
    %v2152 = vld [vmem:[#allocation6 + $0x188] sm:$0xff]
    %v2153 = vld [vmem:[#allocation6 + $0x190] sm:$0xff]
    %v2154 = vld [vmem:[#allocation6 + $0x198] sm:$0xff]
    %v2155 = vld [vmem:[#allocation6 + $0x1a0] sm:$0xff]
    %v2156 = vld [vmem:[#allocation6 + $0x1a8] sm:$0xff]
    %v2157 = vld [vmem:[#allocation6 + $0x1b0] sm:$0xff]
    %v2158 = vld [vmem:[#allocation6 + $0x1b8] sm:$0xff]
    %v2159 = vld [vmem:[#allocation6 + $0x1c0] sm:$0xff]
    %v2160 = vld [vmem:[#allocation6 + $0x1c8] sm:$0xff]
    %v2161 = vld [vmem:[#allocation6 + $0x1d0] sm:$0xff]
    %v2162 = vld [vmem:[#allocation6 + $0x1d8] sm:$0xff]
    %v2163 = vld [vmem:[#allocation6 + $0x1e0] sm:$0xff]
    %v2164 = vld [vmem:[#allocation6 + $0x1e8] sm:$0xff]
    %v2165 = vld [vmem:[#allocation6 + $0x1f0] sm:$0xff]
    %v2166 = vld [vmem:[#allocation6 + $0x1f8] sm:$0xff]
    %v2167 = vld [vmem:[#allocation6 + $0x200] sm:$0xff]
    %v2168 = vld [vmem:[#allocation6 + $0x208] sm:$0xff]
    %v2169 = vld [vmem:[#allocation6 + $0x210] sm:$0xff]
    %v2170 = vld [vmem:[#allocation6 + $0x218] sm:$0xff]
    %v2171 = vld [vmem:[#allocation6 + $0x220] sm:$0xff]
    %v2172 = vld [vmem:[#allocation6 + $0x228] sm:$0xff]
    %v2173 = vld [vmem:[#allocation6 + $0x230] sm:$0xff]
    %v2174 = vld [vmem:[#allocation6 + $0x238] sm:$0xff]
    %v2175 = vld [vmem:[#allocation6 + $0x240] sm:$0xff]
    %v2176 = vld [vmem:[#allocation6 + $0x248] sm:$0xff]
    %v2177 = vld [vmem:[#allocation6 + $0x250] sm:$0xff]
    %v2178 = vld [vmem:[#allocation6 + $0x258] sm:$0xff]
    %v2179 = vld [vmem:[#allocation6 + $0x260] sm:$0xff]
    %v2180 = vld [vmem:[#allocation6 + $0x268] sm:$0xff]
    %v2181 = vld [vmem:[#allocation6 + $0x270] sm:$0xff]
    %v2182 = vld [vmem:[#allocation6 + $0x278] sm:$0xff]
    %v2183 = vld [vmem:[#allocation6 + $0x280] sm:$0xff]
    %v2184 = vld [vmem:[#allocation6 + $0x288] sm:$0xff]
    %v2185 = vld [vmem:[#allocation6 + $0x290] sm:$0xff]
    %v2186 = vld [vmem:[#allocation6 + $0x298] sm:$0xff]
    %v2187 = vld [vmem:[#allocation6 + $0x2a0] sm:$0xff]
    %v2188 = vld [vmem:[#allocation6 + $0x2a8] sm:$0xff]
    %v2189 = vld [vmem:[#allocation6 + $0x2b0] sm:$0xff]
    %v2190 = vld [vmem:[#allocation6 + $0x2b8] sm:$0xff]
    %v2191 = vld [vmem:[#allocation6 + $0x2c0] sm:$0xff]
    %v2192 = vld [vmem:[#allocation6 + $0x2c8] sm:$0xff]
    %v2193 = vld [vmem:[#allocation6 + $0x2d0] sm:$0xff]
    %v2194 = vld [vmem:[#allocation6 + $0x2d8] sm:$0xff]
    %v2195 = vld [vmem:[#allocation6 + $0x2e0] sm:$0xff]
    %v2196 = vld [vmem:[#allocation6 + $0x2e8] sm:$0xff]
    %v2197 = vld [vmem:[#allocation6 + $0x2f0] sm:$0xff]
    %v2198 = vld [vmem:[#allocation6 + $0x2f8] sm:$0xff]
    %v2199 = vld [vmem:[#allocation6 + $0x300] sm:$0xff]
    %v2200 = vld [vmem:[#allocation6 + $0x308] sm:$0xff]
    %v2201 = vld [vmem:[#allocation6 + $0x310] sm:$0xff]
    %v2202 = vld [vmem:[#allocation6 + $0x318] sm:$0xff]
    %v2203 = vld [vmem:[#allocation6 + $0x320] sm:$0xff]
    %v2204 = vld [vmem:[#allocation6 + $0x328] sm:$0xff]
    %v2205 = vld [vmem:[#allocation6 + $0x330] sm:$0xff]
    %v2206 = vld [vmem:[#allocation6 + $0x338] sm:$0xff]
    %v2207 = vld [vmem:[#allocation6 + $0x340] sm:$0xff]
    %v2208 = vld [vmem:[#allocation6 + $0x348] sm:$0xff]
    %v2209 = vld [vmem:[#allocation6 + $0x350] sm:$0xff]
    %v2210 = vld [vmem:[#allocation6 + $0x358] sm:$0xff]
    %v2211 = vld [vmem:[#allocation6 + $0x360] sm:$0xff]
    %v2212 = vld [vmem:[#allocation6 + $0x368] sm:$0xff]
    %v2213 = vld [vmem:[#allocation6 + $0x370] sm:$0xff]
    %v2214 = vld [vmem:[#allocation6 + $0x378] sm:$0xff]
    %v2215 = vld [vmem:[#allocation6 + $0x380] sm:$0xff]
    %v2216 = vld [vmem:[#allocation6 + $0x388] sm:$0xff]
    %v2217 = vld [vmem:[#allocation6 + $0x390] sm:$0xff]
    %v2218 = vld [vmem:[#allocation6 + $0x398] sm:$0xff]
    %v2219 = vld [vmem:[#allocation6 + $0x3a0] sm:$0xff]
    %v2220 = vld [vmem:[#allocation6 + $0x3a8] sm:$0xff]
    %v2221 = vld [vmem:[#allocation6 + $0x3b0] sm:$0xff]
    %v2222 = vld [vmem:[#allocation6 + $0x3b8] sm:$0xff]
    %v2223 = vld [vmem:[#allocation6 + $0x3c0] sm:$0xff]
    %v2224 = vld [vmem:[#allocation6 + $0x3c8] sm:$0xff]
    %v2225 = vld [vmem:[#allocation6 + $0x3d0] sm:$0xff]
    %v2226 = vld [vmem:[#allocation6 + $0x3d8] sm:$0xff]
    %v2227 = vld [vmem:[#allocation6 + $0x3e0] sm:$0xff]
    %v2228 = vld [vmem:[#allocation6 + $0x3e8] sm:$0xff]
    %v2229 = vld [vmem:[#allocation6 + $0x3f0] sm:$0xff]
    %v2230 = vld [vmem:[#allocation6 + $0x3f8] sm:$0xff]
    %v2231 = vld [vmem:[%s6] sm:$0xf]
    %v2233 = vperm.slane %v2231, 0
    %v2234 = vperm.slane %v2231, 1
    %v2235 = vperm.slane %v2231, 2
    %v2236 = vperm.slane %v2231, 3
    %v2369 = vunpack.c.l.b16 %v2103
    %v2370 = vunpack.c.h.b16 %v2103
    %v2371 = vunpack.c.l.b16 %v2104
    %v2372 = vunpack.c.h.b16 %v2104
    %v2373 = vunpack.c.l.b16 %v2105
    %v2374 = vunpack.c.h.b16 %v2105
    %v2375 = vunpack.c.l.b16 %v2106
    %v2376 = vunpack.c.h.b16 %v2106
    %v2377 = vunpack.c.l.b16 %v2107
    %v2378 = vunpack.c.h.b16 %v2107
    %v2379 = vunpack.c.l.b16 %v2108
    %v2380 = vunpack.c.h.b16 %v2108
    %v2381 = vunpack.c.l.b16 %v2109
    %v2382 = vunpack.c.h.b16 %v2109
    %v2383 = vunpack.c.l.b16 %v2110
    %v2384 = vunpack.c.h.b16 %v2110
    %v2385 = vunpack.c.l.b16 %v2111
    %v2386 = vunpack.c.h.b16 %v2111
    %v2387 = vunpack.c.l.b16 %v2112
    %v2388 = vunpack.c.h.b16 %v2112
    %v2389 = vunpack.c.l.b16 %v2113
    %v2390 = vunpack.c.h.b16 %v2113
    %v2391 = vunpack.c.l.b16 %v2114
    %v2392 = vunpack.c.h.b16 %v2114
    %v2393 = vunpack.c.l.b16 %v2115
    %v2394 = vunpack.c.h.b16 %v2115
    %v2395 = vunpack.c.l.b16 %v2116
    %v2396 = vunpack.c.h.b16 %v2116
    %v2397 = vunpack.c.l.b16 %v2117
    %v2398 = vunpack.c.h.b16 %v2117
    %v2399 = vunpack.c.l.b16 %v2118
    %v2400 = vunpack.c.h.b16 %v2118
    %v2401 = vunpack.c.l.b16 %v2119
    %v2402 = vunpack.c.h.b16 %v2119
    %v2403 = vunpack.c.l.b16 %v2120
    %v2404 = vunpack.c.h.b16 %v2120
    %v2405 = vunpack.c.l.b16 %v2121
    %v2406 = vunpack.c.h.b16 %v2121
    %v2407 = vunpack.c.l.b16 %v2122
    %v2408 = vunpack.c.h.b16 %v2122
    %v2409 = vunpack.c.l.b16 %v2123
    %v2410 = vunpack.c.h.b16 %v2123
    %v2411 = vunpack.c.l.b16 %v2124
    %v2412 = vunpack.c.h.b16 %v2124
    %v2413 = vunpack.c.l.b16 %v2125
    %v2414 = vunpack.c.h.b16 %v2125
    %v2415 = vunpack.c.l.b16 %v2126
    %v2416 = vunpack.c.h.b16 %v2126
    %v2417 = vunpack.c.l.b16 %v2127
    %v2418 = vunpack.c.h.b16 %v2127
    %v2419 = vunpack.c.l.b16 %v2128
    %v2420 = vunpack.c.h.b16 %v2128
    %v2421 = vunpack.c.l.b16 %v2129
    %v2422 = vunpack.c.h.b16 %v2129
    %v2423 = vunpack.c.l.b16 %v2130
    %v2424 = vunpack.c.h.b16 %v2130
    %v2425 = vunpack.c.l.b16 %v2131
    %v2426 = vunpack.c.h.b16 %v2131
    %v2427 = vunpack.c.l.b16 %v2132
    %v2428 = vunpack.c.h.b16 %v2132
    %v2429 = vunpack.c.l.b16 %v2133
    %v2430 = vunpack.c.h.b16 %v2133
    %v2431 = vunpack.c.l.b16 %v2134
    %v2432 = vunpack.c.h.b16 %v2134
    %v2433 = vunpack.c.l.b16 %v2135
    %v2434 = vunpack.c.h.b16 %v2135
    %v2435 = vunpack.c.l.b16 %v2136
    %v2436 = vunpack.c.h.b16 %v2136
    %v2437 = vunpack.c.l.b16 %v2137
    %v2438 = vunpack.c.h.b16 %v2137
    %v2439 = vunpack.c.l.b16 %v2138
    %v2440 = vunpack.c.h.b16 %v2138
    %v2441 = vunpack.c.l.b16 %v2139
    %v2442 = vunpack.c.h.b16 %v2139
    %v2443 = vunpack.c.l.b16 %v2140
    %v2444 = vunpack.c.h.b16 %v2140
    %v2445 = vunpack.c.l.b16 %v2141
    %v2446 = vunpack.c.h.b16 %v2141
    %v2447 = vunpack.c.l.b16 %v2142
    %v2448 = vunpack.c.h.b16 %v2142
    %v2449 = vunpack.c.l.b16 %v2143
    %v2450 = vunpack.c.h.b16 %v2143
    %v2451 = vunpack.c.l.b16 %v2144
    %v2452 = vunpack.c.h.b16 %v2144
    %v2453 = vunpack.c.l.b16 %v2145
    %v2454 = vunpack.c.h.b16 %v2145
    %v2455 = vunpack.c.l.b16 %v2146
    %v2456 = vunpack.c.h.b16 %v2146
    %v2457 = vunpack.c.l.b16 %v2147
    %v2458 = vunpack.c.h.b16 %v2147
    %v2459 = vunpack.c.l.b16 %v2148
    %v2460 = vunpack.c.h.b16 %v2148
    %v2461 = vunpack.c.l.b16 %v2149
    %v2462 = vunpack.c.h.b16 %v2149
    %v2463 = vunpack.c.l.b16 %v2150
    %v2464 = vunpack.c.h.b16 %v2150
    %v2465 = vunpack.c.l.b16 %v2151
    %v2466 = vunpack.c.h.b16 %v2151
    %v2467 = vunpack.c.l.b16 %v2152
    %v2468 = vunpack.c.h.b16 %v2152
    %v2469 = vunpack.c.l.b16 %v2153
    %v2470 = vunpack.c.h.b16 %v2153
    %v2471 = vunpack.c.l.b16 %v2154
    %v2472 = vunpack.c.h.b16 %v2154
    %v2473 = vunpack.c.l.b16 %v2155
    %v2474 = vunpack.c.h.b16 %v2155
    %v2475 = vunpack.c.l.b16 %v2156
    %v2476 = vunpack.c.h.b16 %v2156
    %v2477 = vunpack.c.l.b16 %v2157
    %v2478 = vunpack.c.h.b16 %v2157
    %v2479 = vunpack.c.l.b16 %v2158
    %v2480 = vunpack.c.h.b16 %v2158
    %v2481 = vunpack.c.l.b16 %v2159
    %v2482 = vunpack.c.h.b16 %v2159
    %v2483 = vunpack.c.l.b16 %v2160
    %v2484 = vunpack.c.h.b16 %v2160
    %v2485 = vunpack.c.l.b16 %v2161
    %v2486 = vunpack.c.h.b16 %v2161
    %v2487 = vunpack.c.l.b16 %v2162
    %v2488 = vunpack.c.h.b16 %v2162
    %v2489 = vunpack.c.l.b16 %v2163
    %v2490 = vunpack.c.h.b16 %v2163
    %v2491 = vunpack.c.l.b16 %v2164
    %v2492 = vunpack.c.h.b16 %v2164
    %v2493 = vunpack.c.l.b16 %v2165
    %v2494 = vunpack.c.h.b16 %v2165
    %v2495 = vunpack.c.l.b16 %v2166
    %v2496 = vunpack.c.h.b16 %v2166
    %v2497 = vunpack.c.l.b16 %v2167
    %v2498 = vunpack.c.h.b16 %v2167
    %v2499 = vunpack.c.l.b16 %v2168
    %v2500 = vunpack.c.h.b16 %v2168
    %v2501 = vunpack.c.l.b16 %v2169
    %v2502 = vunpack.c.h.b16 %v2169
    %v2503 = vunpack.c.l.b16 %v2170
    %v2504 = vunpack.c.h.b16 %v2170
    %v2505 = vunpack.c.l.b16 %v2171
    %v2506 = vunpack.c.h.b16 %v2171
    %v2507 = vunpack.c.l.b16 %v2172
    %v2508 = vunpack.c.h.b16 %v2172
    %v2509 = vunpack.c.l.b16 %v2173
    %v2510 = vunpack.c.h.b16 %v2173
    %v2511 = vunpack.c.l.b16 %v2174
    %v2512 = vunpack.c.h.b16 %v2174
    %v2513 = vunpack.c.l.b16 %v2175
    %v2514 = vunpack.c.h.b16 %v2175
    %v2515 = vunpack.c.l.b16 %v2176
    %v2516 = vunpack.c.h.b16 %v2176
    %v2517 = vunpack.c.l.b16 %v2177
    %v2518 = vunpack.c.h.b16 %v2177
    %v2519 = vunpack.c.l.b16 %v2178
    %v2520 = vunpack.c.h.b16 %v2178
    %v2521 = vunpack.c.l.b16 %v2179
    %v2522 = vunpack.c.h.b16 %v2179
    %v2523 = vunpack.c.l.b16 %v2180
    %v2524 = vunpack.c.h.b16 %v2180
    %v2525 = vunpack.c.l.b16 %v2181
    %v2526 = vunpack.c.h.b16 %v2181
    %v2527 = vunpack.c.l.b16 %v2182
    %v2528 = vunpack.c.h.b16 %v2182
    %v2529 = vunpack.c.l.b16 %v2183
    %v2530 = vunpack.c.h.b16 %v2183
    %v2531 = vunpack.c.l.b16 %v2184
    %v2532 = vunpack.c.h.b16 %v2184
    %v2533 = vunpack.c.l.b16 %v2185
    %v2534 = vunpack.c.h.b16 %v2185
    %v2535 = vunpack.c.l.b16 %v2186
    %v2536 = vunpack.c.h.b16 %v2186
    %v2537 = vunpack.c.l.b16 %v2187
    %v2538 = vunpack.c.h.b16 %v2187
    %v2539 = vunpack.c.l.b16 %v2188
    %v2540 = vunpack.c.h.b16 %v2188
    %v2541 = vunpack.c.l.b16 %v2189
    %v2542 = vunpack.c.h.b16 %v2189
    %v2543 = vunpack.c.l.b16 %v2190
    %v2544 = vunpack.c.h.b16 %v2190
    %v2545 = vunpack.c.l.b16 %v2191
    %v2546 = vunpack.c.h.b16 %v2191
    %v2547 = vunpack.c.l.b16 %v2192
    %v2548 = vunpack.c.h.b16 %v2192
    %v2549 = vunpack.c.l.b16 %v2193
    %v2550 = vunpack.c.h.b16 %v2193
    %v2551 = vunpack.c.l.b16 %v2194
    %v2552 = vunpack.c.h.b16 %v2194
    %v2553 = vunpack.c.l.b16 %v2195
    %v2554 = vunpack.c.h.b16 %v2195
    %v2555 = vunpack.c.l.b16 %v2196
    %v2556 = vunpack.c.h.b16 %v2196
    %v2557 = vunpack.c.l.b16 %v2197
    %v2558 = vunpack.c.h.b16 %v2197
    %v2559 = vunpack.c.l.b16 %v2198
    %v2560 = vunpack.c.h.b16 %v2198
    %v2561 = vunpack.c.l.b16 %v2199
    %v2562 = vunpack.c.h.b16 %v2199
    %v2563 = vunpack.c.l.b16 %v2200
    %v2564 = vunpack.c.h.b16 %v2200
    %v2565 = vunpack.c.l.b16 %v2201
    %v2566 = vunpack.c.h.b16 %v2201
    %v2567 = vunpack.c.l.b16 %v2202
    %v2568 = vunpack.c.h.b16 %v2202
    %v2569 = vunpack.c.l.b16 %v2203
    %v2570 = vunpack.c.h.b16 %v2203
    %v2571 = vunpack.c.l.b16 %v2204
    %v2572 = vunpack.c.h.b16 %v2204
    %v2573 = vunpack.c.l.b16 %v2205
    %v2574 = vunpack.c.h.b16 %v2205
    %v2575 = vunpack.c.l.b16 %v2206
    %v2576 = vunpack.c.h.b16 %v2206
    %v2577 = vunpack.c.l.b16 %v2207
    %v2578 = vunpack.c.h.b16 %v2207
    %v2579 = vunpack.c.l.b16 %v2208
    %v2580 = vunpack.c.h.b16 %v2208
    %v2581 = vunpack.c.l.b16 %v2209
    %v2582 = vunpack.c.h.b16 %v2209
    %v2583 = vunpack.c.l.b16 %v2210
    %v2584 = vunpack.c.h.b16 %v2210
    %v2585 = vunpack.c.l.b16 %v2211
    %v2586 = vunpack.c.h.b16 %v2211
    %v2587 = vunpack.c.l.b16 %v2212
    %v2588 = vunpack.c.h.b16 %v2212
    %v2589 = vunpack.c.l.b16 %v2213
    %v2590 = vunpack.c.h.b16 %v2213
    %v2591 = vunpack.c.l.b16 %v2214
    %v2592 = vunpack.c.h.b16 %v2214
    %v2593 = vunpack.c.l.b16 %v2215
    %v2594 = vunpack.c.h.b16 %v2215
    %v2595 = vunpack.c.l.b16 %v2216
    %v2596 = vunpack.c.h.b16 %v2216
    %v2597 = vunpack.c.l.b16 %v2217
    %v2598 = vunpack.c.h.b16 %v2217
    %v2599 = vunpack.c.l.b16 %v2218
    %v2600 = vunpack.c.h.b16 %v2218
    %v2601 = vunpack.c.l.b16 %v2219
    %v2602 = vunpack.c.h.b16 %v2219
    %v2603 = vunpack.c.l.b16 %v2220
    %v2604 = vunpack.c.h.b16 %v2220
    %v2605 = vunpack.c.l.b16 %v2221
    %v2606 = vunpack.c.h.b16 %v2221
    %v2607 = vunpack.c.l.b16 %v2222
    %v2608 = vunpack.c.h.b16 %v2222
    %v2609 = vunpack.c.l.b16 %v2223
    %v2610 = vunpack.c.h.b16 %v2223
    %v2611 = vunpack.c.l.b16 %v2224
    %v2612 = vunpack.c.h.b16 %v2224
    %v2613 = vunpack.c.l.b16 %v2225
    %v2614 = vunpack.c.h.b16 %v2225
    %v2615 = vunpack.c.l.b16 %v2226
    %v2616 = vunpack.c.h.b16 %v2226
    %v2617 = vunpack.c.l.b16 %v2227
    %v2618 = vunpack.c.h.b16 %v2227
    %v2619 = vunpack.c.l.b16 %v2228
    %v2620 = vunpack.c.h.b16 %v2228
    %v2621 = vunpack.c.l.b16 %v2229
    %v2622 = vunpack.c.h.b16 %v2229
    %v2623 = vunpack.c.l.b16 %v2230
    %v2624 = vunpack.c.h.b16 %v2230
    %v2625 = vpack.c.b16 %v2373, %v2369
    %v2626 = vpack.c.b16 %v2374, %v2370
    %v2627 = vpack.c.b16 %v2375, %v2371
    %v2628 = vpack.c.b16 %v2376, %v2372
    %v2629 = vpack.c.b16 %v2381, %v2377
    %v2630 = vpack.c.b16 %v2382, %v2378
    %v2631 = vpack.c.b16 %v2383, %v2379
    %v2632 = vpack.c.b16 %v2384, %v2380
    %v2633 = vpack.c.b16 %v2389, %v2385
    %v2634 = vpack.c.b16 %v2390, %v2386
    %v2635 = vpack.c.b16 %v2391, %v2387
    %v2636 = vpack.c.b16 %v2392, %v2388
    %v2637 = vpack.c.b16 %v2397, %v2393
    %v2638 = vpack.c.b16 %v2398, %v2394
    %v2639 = vpack.c.b16 %v2399, %v2395
    %v2640 = vpack.c.b16 %v2400, %v2396
    %v2641 = vpack.c.b16 %v2405, %v2401
    %v2642 = vpack.c.b16 %v2406, %v2402
    %v2643 = vpack.c.b16 %v2407, %v2403
    %v2644 = vpack.c.b16 %v2408, %v2404
    %v2645 = vpack.c.b16 %v2413, %v2409
    %v2646 = vpack.c.b16 %v2414, %v2410
    %v2647 = vpack.c.b16 %v2415, %v2411
    %v2648 = vpack.c.b16 %v2416, %v2412
    %v2649 = vpack.c.b16 %v2421, %v2417
    %v2650 = vpack.c.b16 %v2422, %v2418
    %v2651 = vpack.c.b16 %v2423, %v2419
    %v2652 = vpack.c.b16 %v2424, %v2420
    %v2653 = vpack.c.b16 %v2429, %v2425
    %v2654 = vpack.c.b16 %v2430, %v2426
    %v2655 = vpack.c.b16 %v2431, %v2427
    %v2656 = vpack.c.b16 %v2432, %v2428
    %v2657 = vpack.c.b16 %v2437, %v2433
    %v2658 = vpack.c.b16 %v2438, %v2434
    %v2659 = vpack.c.b16 %v2439, %v2435
    %v2660 = vpack.c.b16 %v2440, %v2436
    %v2661 = vpack.c.b16 %v2445, %v2441
    %v2662 = vpack.c.b16 %v2446, %v2442
    %v2663 = vpack.c.b16 %v2447, %v2443
    %v2664 = vpack.c.b16 %v2448, %v2444
    %v2665 = vpack.c.b16 %v2453, %v2449
    %v2666 = vpack.c.b16 %v2454, %v2450
    %v2667 = vpack.c.b16 %v2455, %v2451
    %v2668 = vpack.c.b16 %v2456, %v2452
    %v2669 = vpack.c.b16 %v2461, %v2457
    %v2670 = vpack.c.b16 %v2462, %v2458
    %v2671 = vpack.c.b16 %v2463, %v2459
    %v2672 = vpack.c.b16 %v2464, %v2460
    %v2673 = vpack.c.b16 %v2469, %v2465
    %v2674 = vpack.c.b16 %v2470, %v2466
    %v2675 = vpack.c.b16 %v2471, %v2467
    %v2676 = vpack.c.b16 %v2472, %v2468
    %v2677 = vpack.c.b16 %v2477, %v2473
    %v2678 = vpack.c.b16 %v2478, %v2474
    %v2679 = vpack.c.b16 %v2479, %v2475
    %v2680 = vpack.c.b16 %v2480, %v2476
    %v2681 = vpack.c.b16 %v2485, %v2481
    %v2682 = vpack.c.b16 %v2486, %v2482
    %v2683 = vpack.c.b16 %v2487, %v2483
    %v2684 = vpack.c.b16 %v2488, %v2484
    %v2685 = vpack.c.b16 %v2493, %v2489
    %v2686 = vpack.c.b16 %v2494, %v2490
    %v2687 = vpack.c.b16 %v2495, %v2491
    %v2688 = vpack.c.b16 %v2496, %v2492
    %v2689 = vpack.c.b16 %v2501, %v2497
    %v2690 = vpack.c.b16 %v2502, %v2498
    %v2691 = vpack.c.b16 %v2503, %v2499
    %v2692 = vpack.c.b16 %v2504, %v2500
    %v2693 = vpack.c.b16 %v2509, %v2505
    %v2694 = vpack.c.b16 %v2510, %v2506
    %v2695 = vpack.c.b16 %v2511, %v2507
    %v2696 = vpack.c.b16 %v2512, %v2508
    %v2697 = vpack.c.b16 %v2517, %v2513
    %v2698 = vpack.c.b16 %v2518, %v2514
    %v2699 = vpack.c.b16 %v2519, %v2515
    %v2700 = vpack.c.b16 %v2520, %v2516
    %v2701 = vpack.c.b16 %v2525, %v2521
    %v2702 = vpack.c.b16 %v2526, %v2522
    %v2703 = vpack.c.b16 %v2527, %v2523
    %v2704 = vpack.c.b16 %v2528, %v2524
    %v2705 = vpack.c.b16 %v2533, %v2529
    %v2706 = vpack.c.b16 %v2534, %v2530
    %v2707 = vpack.c.b16 %v2535, %v2531
    %v2708 = vpack.c.b16 %v2536, %v2532
    %v2709 = vpack.c.b16 %v2541, %v2537
    %v2710 = vpack.c.b16 %v2542, %v2538
    %v2711 = vpack.c.b16 %v2543, %v2539
    %v2712 = vpack.c.b16 %v2544, %v2540
    %v2713 = vpack.c.b16 %v2549, %v2545
    %v2714 = vpack.c.b16 %v2550, %v2546
    %v2715 = vpack.c.b16 %v2551, %v2547
    %v2716 = vpack.c.b16 %v2552, %v2548
    %v2717 = vpack.c.b16 %v2557, %v2553
    %v2718 = vpack.c.b16 %v2558, %v2554
    %v2719 = vpack.c.b16 %v2559, %v2555
    %v2720 = vpack.c.b16 %v2560, %v2556
    %v2721 = vpack.c.b16 %v2565, %v2561
    %v2722 = vpack.c.b16 %v2566, %v2562
    %v2723 = vpack.c.b16 %v2567, %v2563
    %v2724 = vpack.c.b16 %v2568, %v2564
    %v2725 = vpack.c.b16 %v2573, %v2569
    %v2726 = vpack.c.b16 %v2574, %v2570
    %v2727 = vpack.c.b16 %v2575, %v2571
    %v2728 = vpack.c.b16 %v2576, %v2572
    %v2729 = vpack.c.b16 %v2581, %v2577
    %v2730 = vpack.c.b16 %v2582, %v2578
    %v2731 = vpack.c.b16 %v2583, %v2579
    %v2732 = vpack.c.b16 %v2584, %v2580
    %v2733 = vpack.c.b16 %v2589, %v2585
    %v2734 = vpack.c.b16 %v2590, %v2586
    %v2735 = vpack.c.b16 %v2591, %v2587
    %v2736 = vpack.c.b16 %v2592, %v2588
    %v2737 = vpack.c.b16 %v2597, %v2593
    %v2738 = vpack.c.b16 %v2598, %v2594
    %v2739 = vpack.c.b16 %v2599, %v2595
    %v2740 = vpack.c.b16 %v2600, %v2596
    %v2741 = vpack.c.b16 %v2605, %v2601
    %v2742 = vpack.c.b16 %v2606, %v2602
    %v2743 = vpack.c.b16 %v2607, %v2603
    %v2744 = vpack.c.b16 %v2608, %v2604
    %v2745 = vpack.c.b16 %v2613, %v2609
    %v2746 = vpack.c.b16 %v2614, %v2610
    %v2747 = vpack.c.b16 %v2615, %v2611
    %v2748 = vpack.c.b16 %v2616, %v2612
    %v2749 = vpack.c.b16 %v2621, %v2617
    %v2750 = vpack.c.b16 %v2622, %v2618
    %v2751 = vpack.c.b16 %v2623, %v2619
    %v2752 = vpack.c.b16 %v2624, %v2620
    %2881 = vmatpush.bf16.msra.mxu0 %v2653
    %2882 = vmatpush.bf16.msra.mxu0 %v2649
    %2883 = vmatpush.bf16.msra.mxu0 %v2645
    %2884 = vmatpush.bf16.msra.mxu0 %v2641
    %2885 = vmatpush.bf16.msra.mxu0 %v2637
    %2886 = vmatpush.bf16.msra.mxu0 %v2633
    %2887 = vmatpush.bf16.msra.mxu0 %v2629
    %2888 = vmatpush.bf16.msra.mxu0 %v2625
    %2889 = vmatmul.bf16.gmra.mxu0 %v2099
    %v2890 = vpop.f32.mrf.mxu0
    %v2891 = vadd.f32 %v2233, %v2890
    %v2892 = vpop.f32.mrf.mxu0
    %2893 = vdwg.mxu0
    %2894 = vmatpush.bf16.msra.mxu0 %v2685
    %2895 = vmatpush.bf16.msra.mxu0 %v2681
    %2896 = vmatpush.bf16.msra.mxu0 %v2677
    %2897 = vmatpush.bf16.msra.mxu0 %v2673
    %2898 = vmatpush.bf16.msra.mxu0 %v2669
    %2899 = vmatpush.bf16.msra.mxu0 %v2665
    %2900 = vmatpush.bf16.msra.mxu0 %v2661
    %2901 = vmatpush.bf16.msra.mxu0 %v2657
    %2902 = vmatmul.bf16.gmra.mxu0 %v2100
    %v2903 = vpop.f32.mrf.mxu0
    %v2904 = vadd.f32 %v2891, %v2903
    %v2905 = vpop.f32.mrf.mxu0
    %2906 = vdwg.mxu0
    %2907 = vmatpush.bf16.msra.mxu0 %v2717
    %2908 = vmatpush.bf16.msra.mxu0 %v2713
    %2909 = vmatpush.bf16.msra.mxu0 %v2709
    %2910 = vmatpush.bf16.msra.mxu0 %v2705
    %2911 = vmatpush.bf16.msra.mxu0 %v2701
    %2912 = vmatpush.bf16.msra.mxu0 %v2697
    %2913 = vmatpush.bf16.msra.mxu0 %v2693
    %2914 = vmatpush.bf16.msra.mxu0 %v2689
    %2915 = vmatmul.bf16.gmra.mxu0 %v2101
    %v2916 = vpop.f32.mrf.mxu0
    %v2917 = vadd.f32 %v2904, %v2916
    %v2918 = vpop.f32.mrf.mxu0
    %2919 = vdwg.mxu0
    %2920 = vmatpush.bf16.msra.mxu0 %v2749
    %2921 = vmatpush.bf16.msra.mxu0 %v2745
    %2922 = vmatpush.bf16.msra.mxu0 %v2741
    %2923 = vmatpush.bf16.msra.mxu0 %v2737
    %2924 = vmatpush.bf16.msra.mxu0 %v2733
    %2925 = vmatpush.bf16.msra.mxu0 %v2729
    %2926 = vmatpush.bf16.msra.mxu0 %v2725
    %2927 = vmatpush.bf16.msra.mxu0 %v2721
    %2928 = vmatmul.bf16.gmra.mxu0 %v2102
    %v2929 = vpop.f32.mrf.mxu0
    %v2930 = vadd.f32 %v2917, %v2929
    %v2931 = vpop.f32.mrf.mxu0
    %2932 = vdwg.mxu0
    %2933 = vmatpush.bf16.msra.mxu0 %v2654
    %2934 = vmatpush.bf16.msra.mxu0 %v2650
    %2935 = vmatpush.bf16.msra.mxu0 %v2646
    %2936 = vmatpush.bf16.msra.mxu0 %v2642
    %2937 = vmatpush.bf16.msra.mxu0 %v2638
    %2938 = vmatpush.bf16.msra.mxu0 %v2634
    %2939 = vmatpush.bf16.msra.mxu0 %v2630
    %2940 = vmatpush.bf16.msra.mxu0 %v2626
    %2941 = vmatmul.bf16.gmra.mxu0 %v2099
    %v2942 = vpop.f32.mrf.mxu0
    %v2943 = vadd.f32 %v2234, %v2942
    %v2944 = vpop.f32.mrf.mxu0
    %2945 = vdwg.mxu0
    %2946 = vmatpush.bf16.msra.mxu0 %v2686
    %2947 = vmatpush.bf16.msra.mxu0 %v2682
    %2948 = vmatpush.bf16.msra.mxu0 %v2678
    %2949 = vmatpush.bf16.msra.mxu0 %v2674
    %2950 = vmatpush.bf16.msra.mxu0 %v2670
    %2951 = vmatpush.bf16.msra.mxu0 %v2666
    %2952 = vmatpush.bf16.msra.mxu0 %v2662
    %2953 = vmatpush.bf16.msra.mxu0 %v2658
    %2954 = vmatmul.bf16.gmra.mxu0 %v2100
    %v2955 = vpop.f32.mrf.mxu0
    %v2956 = vadd.f32 %v2943, %v2955
    %v2957 = vpop.f32.mrf.mxu0
    %2958 = vdwg.mxu0
    %2959 = vmatpush.bf16.msra.mxu0 %v2718
    %2960 = vmatpush.bf16.msra.mxu0 %v2714
    %2961 = vmatpush.bf16.msra.mxu0 %v2710
    %2962 = vmatpush.bf16.msra.mxu0 %v2706
    %2963 = vmatpush.bf16.msra.mxu0 %v2702
    %2964 = vmatpush.bf16.msra.mxu0 %v2698
    %2965 = vmatpush.bf16.msra.mxu0 %v2694
    %2966 = vmatpush.bf16.msra.mxu0 %v2690
    %2967 = vmatmul.bf16.gmra.mxu0 %v2101
    %v2968 = vpop.f32.mrf.mxu0
    %v2969 = vadd.f32 %v2956, %v2968
    %v2970 = vpop.f32.mrf.mxu0
    %2971 = vdwg.mxu0
    %2972 = vmatpush.bf16.msra.mxu0 %v2750
    %2973 = vmatpush.bf16.msra.mxu0 %v2746
    %2974 = vmatpush.bf16.msra.mxu0 %v2742
    %2975 = vmatpush.bf16.msra.mxu0 %v2738
    %2976 = vmatpush.bf16.msra.mxu0 %v2734
    %2977 = vmatpush.bf16.msra.mxu0 %v2730
    %2978 = vmatpush.bf16.msra.mxu0 %v2726
    %2979 = vmatpush.bf16.msra.mxu0 %v2722
    %2980 = vmatmul.bf16.gmra.mxu0 %v2102
    %v2981 = vpop.f32.mrf.mxu0
    %v2982 = vadd.f32 %v2969, %v2981
    %v2983 = vpop.f32.mrf.mxu0
    %2984 = vdwg.mxu0
    %2985 = vmatpush.bf16.msra.mxu0 %v2655
    %2986 = vmatpush.bf16.msra.mxu0 %v2651
    %2987 = vmatpush.bf16.msra.mxu0 %v2647
    %2988 = vmatpush.bf16.msra.mxu0 %v2643
    %2989 = vmatpush.bf16.msra.mxu0 %v2639
    %2990 = vmatpush.bf16.msra.mxu0 %v2635
    %2991 = vmatpush.bf16.msra.mxu0 %v2631
    %2992 = vmatpush.bf16.msra.mxu0 %v2627
    %2993 = vmatmul.bf16.gmra.mxu0 %v2099
    %v2994 = vpop.f32.mrf.mxu0
    %v2995 = vadd.f32 %v2235, %v2994
    %v2996 = vpop.f32.mrf.mxu0
    %2997 = vdwg.mxu0
    %2998 = vmatpush.bf16.msra.mxu0 %v2687
    %2999 = vmatpush.bf16.msra.mxu0 %v2683
    %3000 = vmatpush.bf16.msra.mxu0 %v2679
    %3001 = vmatpush.bf16.msra.mxu0 %v2675
    %3002 = vmatpush.bf16.msra.mxu0 %v2671
    %3003 = vmatpush.bf16.msra.mxu0 %v2667
    %3004 = vmatpush.bf16.msra.mxu0 %v2663
    %3005 = vmatpush.bf16.msra.mxu0 %v2659
    %3006 = vmatmul.bf16.gmra.mxu0 %v2100
    %v3007 = vpop.f32.mrf.mxu0
    %v3008 = vadd.f32 %v2995, %v3007
    %v3009 = vpop.f32.mrf.mxu0
    %3010 = vdwg.mxu0
    %3011 = vmatpush.bf16.msra.mxu0 %v2719
    %3012 = vmatpush.bf16.msra.mxu0 %v2715
    %3013 = vmatpush.bf16.msra.mxu0 %v2711
    %3014 = vmatpush.bf16.msra.mxu0 %v2707
    %3015 = vmatpush.bf16.msra.mxu0 %v2703
    %3016 = vmatpush.bf16.msra.mxu0 %v2699
    %3017 = vmatpush.bf16.msra.mxu0 %v2695
    %3018 = vmatpush.bf16.msra.mxu0 %v2691
    %3019 = vmatmul.bf16.gmra.mxu0 %v2101
    %v3020 = vpop.f32.mrf.mxu0
    %v3021 = vadd.f32 %v3008, %v3020
    %v3022 = vpop.f32.mrf.mxu0
    %3023 = vdwg.mxu0
    %3024 = vmatpush.bf16.msra.mxu0 %v2751
    %3025 = vmatpush.bf16.msra.mxu0 %v2747
    %3026 = vmatpush.bf16.msra.mxu0 %v2743
    %3027 = vmatpush.bf16.msra.mxu0 %v2739
    %3028 = vmatpush.bf16.msra.mxu0 %v2735
    %3029 = vmatpush.bf16.msra.mxu0 %v2731
    %3030 = vmatpush.bf16.msra.mxu0 %v2727
    %3031 = vmatpush.bf16.msra.mxu0 %v2723
    %3032 = vmatmul.bf16.gmra.mxu0 %v2102
    %v3033 = vpop.f32.mrf.mxu0
    %v3034 = vadd.f32 %v3021, %v3033
    %v3035 = vpop.f32.mrf.mxu0
    %3036 = vdwg.mxu0
    %3037 = vmatpush.bf16.msra.mxu0 %v2656
    %3038 = vmatpush.bf16.msra.mxu0 %v2652
    %3039 = vmatpush.bf16.msra.mxu0 %v2648
    %3040 = vmatpush.bf16.msra.mxu0 %v2644
    %3041 = vmatpush.bf16.msra.mxu0 %v2640
    %3042 = vmatpush.bf16.msra.mxu0 %v2636
    %3043 = vmatpush.bf16.msra.mxu0 %v2632
    %3044 = vmatpush.bf16.msra.mxu0 %v2628
    %3045 = vmatmul.bf16.gmra.mxu0 %v2099
    %v3046 = vpop.f32.mrf.mxu0
    %v3047 = vadd.f32 %v2236, %v3046
    %v3048 = vpop.f32.mrf.mxu0
    %3049 = vdwg.mxu0
    %3050 = vmatpush.bf16.msra.mxu0 %v2688
    %3051 = vmatpush.bf16.msra.mxu0 %v2684
    %3052 = vmatpush.bf16.msra.mxu0 %v2680
    %3053 = vmatpush.bf16.msra.mxu0 %v2676
    %3054 = vmatpush.bf16.msra.mxu0 %v2672
    %3055 = vmatpush.bf16.msra.mxu0 %v2668
    %3056 = vmatpush.bf16.msra.mxu0 %v2664
    %3057 = vmatpush.bf16.msra.mxu0 %v2660
    %3058 = vmatmul.bf16.gmra.mxu0 %v2100
    %v3059 = vpop.f32.mrf.mxu0
    %v3060 = vadd.f32 %v3047, %v3059
    %v3061 = vpop.f32.mrf.mxu0
    %3062 = vdwg.mxu0
    %3063 = vmatpush.bf16.msra.mxu0 %v2720
    %3064 = vmatpush.bf16.msra.mxu0 %v2716
    %3065 = vmatpush.bf16.msra.mxu0 %v2712
    %3066 = vmatpush.bf16.msra.mxu0 %v2708
    %3067 = vmatpush.bf16.msra.mxu0 %v2704
    %3068 = vmatpush.bf16.msra.mxu0 %v2700
    %3069 = vmatpush.bf16.msra.mxu0 %v2696
    %3070 = vmatpush.bf16.msra.mxu0 %v2692
    %3071 = vmatmul.bf16.gmra.mxu0 %v2101
    %v3072 = vpop.f32.mrf.mxu0
    %v3073 = vadd.f32 %v3060, %v3072
    %v3074 = vpop.f32.mrf.mxu0
    %3075 = vdwg.mxu0
    %3076 = vmatpush.bf16.msra.mxu0 %v2752
    %3077 = vmatpush.bf16.msra.mxu0 %v2748
    %3078 = vmatpush.bf16.msra.mxu0 %v2744
    %3079 = vmatpush.bf16.msra.mxu0 %v2740
    %3080 = vmatpush.bf16.msra.mxu0 %v2736
    %3081 = vmatpush.bf16.msra.mxu0 %v2732
    %3082 = vmatpush.bf16.msra.mxu0 %v2728
    %3083 = vmatpush.bf16.msra.mxu0 %v2724
    %3084 = vmatmul.bf16.gmra.mxu0 %v2102
    %v3085 = vpop.f32.mrf.mxu0
    %v3086 = vadd.f32 %v3073, %v3085
    %v3087 = vpop.f32.mrf.mxu0
    %3088 = vdwg.mxu0
    %v3089 = vpack.c.bf16 %v2982, %v2930
    %v3090 = vpack.c.bf16 %v3086, %v3034
    %v3091 = vunpack.c.l.bf16 %v3089
    %v3092 = vunpack.c.h.bf16 %v3089
    %v3093 = vunpack.c.l.bf16 %v3090
    %v3094 = vunpack.c.h.bf16 %v3090
    %v3095 = vmax.f32 %v3091, 0.0
    %v3096 = vmax.f32 %v3092, 0.0
    %v3097 = vmax.f32 %v3093, 0.0
    %v3098 = vmax.f32 %v3094, 0.0
    %v3099 = vpack.c.bf16 %v3095, %v3095
    %v3100 = vpack.c.bf16 %v3096, %v3096
    %v3101 = vpack.c.bf16 %v3097, %v3097
    %v3102 = vpack.c.bf16 %v3098, %v3098
    %v3103 = vld [vmem:[#allocation7] sm:$0xf]
    %v3104 = vld [vmem:[#allocation7 + $0x4] sm:$0xf]
    %v3105 = vld [vmem:[#allocation7 + $0x8] sm:$0xf]
    %v3106 = vld [vmem:[#allocation7 + $0xc] sm:$0xf]
    %v3107 = vld [vmem:[#allocation7 + $0x10] sm:$0xf]
    %v3108 = vld [vmem:[#allocation7 + $0x14] sm:$0xf]
    %v3109 = vld [vmem:[#allocation7 + $0x18] sm:$0xf]
    %v3110 = vld [vmem:[#allocation7 + $0x1c] sm:$0xf]
    %v3111 = vld [vmem:[#allocation7 + $0x20] sm:$0xf]
    %v3112 = vld [vmem:[#allocation7 + $0x24] sm:$0xf]
    %v3113 = vld [vmem:[#allocation7 + $0x28] sm:$0xf]
    %v3114 = vld [vmem:[#allocation7 + $0x2c] sm:$0xf]
    %v3115 = vld [vmem:[#allocation7 + $0x30] sm:$0xf]
    %v3116 = vld [vmem:[#allocation7 + $0x34] sm:$0xf]
    %v3117 = vld [vmem:[#allocation7 + $0x38] sm:$0xf]
    %v3118 = vld [vmem:[#allocation7 + $0x3c] sm:$0xf]
    %v3119 = vld [vmem:[#allocation7 + $0x40] sm:$0xf]
    %v3120 = vld [vmem:[#allocation7 + $0x44] sm:$0xf]
    %v3121 = vld [vmem:[#allocation7 + $0x48] sm:$0xf]
    %v3122 = vld [vmem:[#allocation7 + $0x4c] sm:$0xf]
    %v3123 = vld [vmem:[#allocation7 + $0x50] sm:$0xf]
    %v3124 = vld [vmem:[#allocation7 + $0x54] sm:$0xf]
    %v3125 = vld [vmem:[#allocation7 + $0x58] sm:$0xf]
    %v3126 = vld [vmem:[#allocation7 + $0x5c] sm:$0xf]
    %v3127 = vld [vmem:[#allocation7 + $0x60] sm:$0xf]
    %v3128 = vld [vmem:[#allocation7 + $0x64] sm:$0xf]
    %v3129 = vld [vmem:[#allocation7 + $0x68] sm:$0xf]
    %v3130 = vld [vmem:[#allocation7 + $0x6c] sm:$0xf]
    %v3131 = vld [vmem:[#allocation7 + $0x70] sm:$0xf]
    %v3132 = vld [vmem:[#allocation7 + $0x74] sm:$0xf]
    %v3133 = vld [vmem:[#allocation7 + $0x78] sm:$0xf]
    %v3134 = vld [vmem:[#allocation7 + $0x7c] sm:$0xf]
    %v3135 = vld [vmem:[#allocation7 + $0x80] sm:$0xf]
    %v3136 = vld [vmem:[#allocation7 + $0x84] sm:$0xf]
    %v3137 = vld [vmem:[#allocation7 + $0x88] sm:$0xf]
    %v3138 = vld [vmem:[#allocation7 + $0x8c] sm:$0xf]
    %v3139 = vld [vmem:[#allocation7 + $0x90] sm:$0xf]
    %v3140 = vld [vmem:[#allocation7 + $0x94] sm:$0xf]
    %v3141 = vld [vmem:[#allocation7 + $0x98] sm:$0xf]
    %v3142 = vld [vmem:[#allocation7 + $0x9c] sm:$0xf]
    %v3143 = vld [vmem:[#allocation7 + $0xa0] sm:$0xf]
    %v3144 = vld [vmem:[#allocation7 + $0xa4] sm:$0xf]
    %v3145 = vld [vmem:[#allocation7 + $0xa8] sm:$0xf]
    %v3146 = vld [vmem:[#allocation7 + $0xac] sm:$0xf]
    %v3147 = vld [vmem:[#allocation7 + $0xb0] sm:$0xf]
    %v3148 = vld [vmem:[#allocation7 + $0xb4] sm:$0xf]
    %v3149 = vld [vmem:[#allocation7 + $0xb8] sm:$0xf]
    %v3150 = vld [vmem:[#allocation7 + $0xbc] sm:$0xf]
    %v3151 = vld [vmem:[#allocation7 + $0xc0] sm:$0xf]
    %v3152 = vld [vmem:[#allocation7 + $0xc4] sm:$0xf]
    %v3153 = vld [vmem:[#allocation7 + $0xc8] sm:$0xf]
    %v3154 = vld [vmem:[#allocation7 + $0xcc] sm:$0xf]
    %v3155 = vld [vmem:[#allocation7 + $0xd0] sm:$0xf]
    %v3156 = vld [vmem:[#allocation7 + $0xd4] sm:$0xf]
    %v3157 = vld [vmem:[#allocation7 + $0xd8] sm:$0xf]
    %v3158 = vld [vmem:[#allocation7 + $0xdc] sm:$0xf]
    %v3159 = vld [vmem:[#allocation7 + $0xe0] sm:$0xf]
    %v3160 = vld [vmem:[#allocation7 + $0xe4] sm:$0xf]
    %v3161 = vld [vmem:[#allocation7 + $0xe8] sm:$0xf]
    %v3162 = vld [vmem:[#allocation7 + $0xec] sm:$0xf]
    %v3163 = vld [vmem:[#allocation7 + $0xf0] sm:$0xf]
    %v3164 = vld [vmem:[#allocation7 + $0xf4] sm:$0xf]
    %v3165 = vld [vmem:[#allocation7 + $0xf8] sm:$0xf]
    %v3166 = vld [vmem:[#allocation7 + $0xfc] sm:$0xf]
    %v3167 = vld [vmem:[%s8] sm:$0x1]
    %v3169 = vperm.slane %v3167, 0
    %v3235 = vunpack.c.l.b16 %v3103
    %v3236 = vunpack.c.l.b16 %v3104
    %v3237 = vunpack.c.l.b16 %v3105
    %v3238 = vunpack.c.l.b16 %v3106
    %v3239 = vunpack.c.l.b16 %v3107
    %v3240 = vunpack.c.l.b16 %v3108
    %v3241 = vunpack.c.l.b16 %v3109
    %v3242 = vunpack.c.l.b16 %v3110
    %v3243 = vunpack.c.l.b16 %v3111
    %v3244 = vunpack.c.l.b16 %v3112
    %v3245 = vunpack.c.l.b16 %v3113
    %v3246 = vunpack.c.l.b16 %v3114
    %v3247 = vunpack.c.l.b16 %v3115
    %v3248 = vunpack.c.l.b16 %v3116
    %v3249 = vunpack.c.l.b16 %v3117
    %v3250 = vunpack.c.l.b16 %v3118
    %v3251 = vunpack.c.l.b16 %v3119
    %v3252 = vunpack.c.l.b16 %v3120
    %v3253 = vunpack.c.l.b16 %v3121
    %v3254 = vunpack.c.l.b16 %v3122
    %v3255 = vunpack.c.l.b16 %v3123
    %v3256 = vunpack.c.l.b16 %v3124
    %v3257 = vunpack.c.l.b16 %v3125
    %v3258 = vunpack.c.l.b16 %v3126
    %v3259 = vunpack.c.l.b16 %v3127
    %v3260 = vunpack.c.l.b16 %v3128
    %v3261 = vunpack.c.l.b16 %v3129
    %v3262 = vunpack.c.l.b16 %v3130
    %v3263 = vunpack.c.l.b16 %v3131
    %v3264 = vunpack.c.l.b16 %v3132
    %v3265 = vunpack.c.l.b16 %v3133
    %v3266 = vunpack.c.l.b16 %v3134
    %v3267 = vunpack.c.l.b16 %v3135
    %v3268 = vunpack.c.l.b16 %v3136
    %v3269 = vunpack.c.l.b16 %v3137
    %v3270 = vunpack.c.l.b16 %v3138
    %v3271 = vunpack.c.l.b16 %v3139
    %v3272 = vunpack.c.l.b16 %v3140
    %v3273 = vunpack.c.l.b16 %v3141
    %v3274 = vunpack.c.l.b16 %v3142
    %v3275 = vunpack.c.l.b16 %v3143
    %v3276 = vunpack.c.l.b16 %v3144
    %v3277 = vunpack.c.l.b16 %v3145
    %v3278 = vunpack.c.l.b16 %v3146
    %v3279 = vunpack.c.l.b16 %v3147
    %v3280 = vunpack.c.l.b16 %v3148
    %v3281 = vunpack.c.l.b16 %v3149
    %v3282 = vunpack.c.l.b16 %v3150
    %v3283 = vunpack.c.l.b16 %v3151
    %v3284 = vunpack.c.l.b16 %v3152
    %v3285 = vunpack.c.l.b16 %v3153
    %v3286 = vunpack.c.l.b16 %v3154
    %v3287 = vunpack.c.l.b16 %v3155
    %v3288 = vunpack.c.l.b16 %v3156
    %v3289 = vunpack.c.l.b16 %v3157
    %v3290 = vunpack.c.l.b16 %v3158
    %v3291 = vunpack.c.l.b16 %v3159
    %v3292 = vunpack.c.l.b16 %v3160
    %v3293 = vunpack.c.l.b16 %v3161
    %v3294 = vunpack.c.l.b16 %v3162
    %v3295 = vunpack.c.l.b16 %v3163
    %v3296 = vunpack.c.l.b16 %v3164
    %v3297 = vunpack.c.l.b16 %v3165
    %v3298 = vunpack.c.l.b16 %v3166
    %v3299 = vpack.c.b16 %v3236, %v3235
    %v3300 = vpack.c.b16 %v3238, %v3237
    %v3301 = vpack.c.b16 %v3240, %v3239
    %v3302 = vpack.c.b16 %v3242, %v3241
    %v3303 = vpack.c.b16 %v3244, %v3243
    %v3304 = vpack.c.b16 %v3246, %v3245
    %v3305 = vpack.c.b16 %v3248, %v3247
    %v3306 = vpack.c.b16 %v3250, %v3249
    %v3307 = vpack.c.b16 %v3252, %v3251
    %v3308 = vpack.c.b16 %v3254, %v3253
    %v3309 = vpack.c.b16 %v3256, %v3255
    %v3310 = vpack.c.b16 %v3258, %v3257
    %v3311 = vpack.c.b16 %v3260, %v3259
    %v3312 = vpack.c.b16 %v3262, %v3261
    %v3313 = vpack.c.b16 %v3264, %v3263
    %v3314 = vpack.c.b16 %v3266, %v3265
    %v3315 = vpack.c.b16 %v3268, %v3267
    %v3316 = vpack.c.b16 %v3270, %v3269
    %v3317 = vpack.c.b16 %v3272, %v3271
    %v3318 = vpack.c.b16 %v3274, %v3273
    %v3319 = vpack.c.b16 %v3276, %v3275
    %v3320 = vpack.c.b16 %v3278, %v3277
    %v3321 = vpack.c.b16 %v3280, %v3279
    %v3322 = vpack.c.b16 %v3282, %v3281
    %v3323 = vpack.c.b16 %v3284, %v3283
    %v3324 = vpack.c.b16 %v3286, %v3285
    %v3325 = vpack.c.b16 %v3288, %v3287
    %v3326 = vpack.c.b16 %v3290, %v3289
    %v3327 = vpack.c.b16 %v3292, %v3291
    %v3328 = vpack.c.b16 %v3294, %v3293
    %v3329 = vpack.c.b16 %v3296, %v3295
    %v3330 = vpack.c.b16 %v3298, %v3297
    %3363 = vmatpush.bf16.msra.mxu0 %v3306
    %3364 = vmatpush.bf16.msra.mxu0 %v3305
    %3365 = vmatpush.bf16.msra.mxu0 %v3304
    %3366 = vmatpush.bf16.msra.mxu0 %v3303
    %3367 = vmatpush.bf16.msra.mxu0 %v3302
    %3368 = vmatpush.bf16.msra.mxu0 %v3301
    %3369 = vmatpush.bf16.msra.mxu0 %v3300
    %3370 = vmatpush.bf16.msra.mxu0 %v3299
    %3371 = vmatmul.bf16.gmra.mxu0 %v3099
    %v3372 = vpop.f32.mrf.mxu0
    %v3373 = vadd.f32 %v3169, %v3372
    %v3374 = vpop.f32.mrf.mxu0
    %3375 = vdwg.mxu0
    %3376 = vmatpush.bf16.msra.mxu0 %v3314
    %3377 = vmatpush.bf16.msra.mxu0 %v3313
    %3378 = vmatpush.bf16.msra.mxu0 %v3312
    %3379 = vmatpush.bf16.msra.mxu0 %v3311
    %3380 = vmatpush.bf16.msra.mxu0 %v3310
    %3381 = vmatpush.bf16.msra.mxu0 %v3309
    %3382 = vmatpush.bf16.msra.mxu0 %v3308
    %3383 = vmatpush.bf16.msra.mxu0 %v3307
    %3384 = vmatmul.bf16.gmra.mxu0 %v3100
    %v3385 = vpop.f32.mrf.mxu0
    %v3386 = vadd.f32 %v3373, %v3385
    %v3387 = vpop.f32.mrf.mxu0
    %3388 = vdwg.mxu0
    %3389 = vmatpush.bf16.msra.mxu0 %v3322
    %3390 = vmatpush.bf16.msra.mxu0 %v3321
    %3391 = vmatpush.bf16.msra.mxu0 %v3320
    %3392 = vmatpush.bf16.msra.mxu0 %v3319
    %3393 = vmatpush.bf16.msra.mxu0 %v3318
    %3394 = vmatpush.bf16.msra.mxu0 %v3317
    %3395 = vmatpush.bf16.msra.mxu0 %v3316
    %3396 = vmatpush.bf16.msra.mxu0 %v3315
    %3397 = vmatmul.bf16.gmra.mxu0 %v3101
    %v3398 = vpop.f32.mrf.mxu0
    %v3399 = vadd.f32 %v3386, %v3398
    %v3400 = vpop.f32.mrf.mxu0
    %3401 = vdwg.mxu0
    %3402 = vmatpush.bf16.msra.mxu0 %v3330
    %3403 = vmatpush.bf16.msra.mxu0 %v3329
    %3404 = vmatpush.bf16.msra.mxu0 %v3328
    %3405 = vmatpush.bf16.msra.mxu0 %v3327
    %3406 = vmatpush.bf16.msra.mxu0 %v3326
    %3407 = vmatpush.bf16.msra.mxu0 %v3325
    %3408 = vmatpush.bf16.msra.mxu0 %v3324
    %3409 = vmatpush.bf16.msra.mxu0 %v3323
    %3410 = vmatmul.bf16.gmra.mxu0 %v3102
    %v3411 = vpop.f32.mrf.mxu0
    %v3412 = vadd.f32 %v3399, %v3411
    %v3413 = vpop.f32.mrf.mxu0
    %3414 = vdwg.mxu0
    %3415 = vst [vmem:[%s9] sm:$0xff] %v3412
    // Predicated region
    $region54: #{value_forward.1} parent=1 // pred_check
      _
    $region55: #{value_forward.1} parent=1 // pred_check_branch
      %3417 = sbr.rel (0) target = $region57
    $region56: #{value_forward.1} parent=1 // pred_region
      _
    $region57: #{value_forward.1} parent=1 // pred_fallthru
      _
    // Predicated region
    $region58: #{value_forward.1} parent=1 // pred_check
      _
    $region59: #{value_forward.1} parent=1 // pred_check_branch
      %3419 = sbr.rel (0) target = $region61
    $region60: #{value_forward.1} parent=1 // pred_region
      _
    $region61: #{value_forward.1} parent=1 // pred_fallthru
      _
    %3420 = vsyncpa [#allocation3], 1
    %3421 = vsyncpa [#allocation5], 1
    %3422 = vsyncpa [#allocation8], 1

</llo_original>
